<compile_context>
chip_gen: v7x
topology: tpu7x:2x2x1
jax: 0.10.0
libtpu: 0.0.40
codegen_flags: <defaults>
</compile_context>

<pallas_src>
import jax
import jax.numpy as jnp
from jax.experimental import pallas as pl
from jax.experimental.pallas import tpu as pltpu


# ----------------------------- hyper parameters -----------------------------
MAX_FEATURES = 100
EMB_SIZE = 32
LSTM_HIDDEN = 32          # first LSTM hidden size (bidirectional -> 2*H out)
LSTM_OUT_HIDDEN = 32      # second LSTM hidden size (unidirectional)
OUTPUT_CLASS = 8
BATCH = 2
SEQ = 8

BATCH_PAD = 8             # pad batch to one full sublane tile
OUT_PAD = 128             # lane-dense output width

# ------------------------- packed weight-slab layout ------------------------
# One (SLAB_ROWS, 256) f32 slab; every section starts on an 8-row boundary.
R_WIN = 0                                     # (2E, 8H)  fused input weights
R_WHH1 = R_WIN + 2 * EMB_SIZE                 # (2H, 8H)  block-diag recurrent
R_B1 = R_WHH1 + 2 * LSTM_HIDDEN               # (1, 8H)   fused layer-1 bias
R_WIH2 = R_B1 + 8                             # (2H, 4H2) layer-2 input
R_WHH2 = R_WIH2 + 2 * LSTM_HIDDEN             # (H2, 4H2) layer-2 recurrent
R_B2 = R_WHH2 + LSTM_OUT_HIDDEN               # (1, 4H2)  layer-2 bias
R_WFC = R_B2 + 8                              # (H2, 128) fc weight (padded)
R_BFC = R_WFC + LSTM_OUT_HIDDEN               # (1, 128)  fc bias (padded -1e30)
SLAB_ROWS = R_BFC + 8
SLAB_COLS = 8 * LSTM_HIDDEN                   # 256


# ------------------------------ fused kernel --------------------------------
def fused_model_kernel(x_ref, w_ref, out_ref):
    """BiLSTM -> LSTM -> last hidden -> Linear -> log_softmax, all fused.

    x_ref:   (T*BP, 2E)  rows = time-major (BP rows per step); per row the
             first E lanes are emb(token at time s), last E lanes are
             emb(token at time T-1-s) (feeds the fused fwd/bwd recurrence).
    w_ref:   (SLAB_ROWS, 256) packed weight slab (layout above).
             Combined layer-1 gate column order (width 8H):
             [i_f i_b | f_f f_b | o_f o_b | g_f g_b], H lanes each.
    out_ref: (BP, 128)   lane-dense log-probabilities (cols >= C are junk).
    """
    E, H, H2, BP = EMB_SIZE, LSTM_HIDDEN, LSTM_OUT_HIDDEN, BATCH_PAD
    T = x_ref.shape[0] // BP

    # ---- static, aligned slab slices ----------------------------------------
    w_in = w_ref[R_WIN:R_WIN + 2 * E, :]                     # (2E, 8H)
    w_hh1 = w_ref[R_WHH1:R_WHH1 + 2 * H, :]                  # (2H, 8H)
    b1 = w_ref[R_B1:R_B1 + 1, :]                             # (1, 8H)
    w_ih2 = w_ref[R_WIH2:R_WIH2 + 2 * H, :4 * H2]            # (2H, 4H2)
    w_hh2 = w_ref[R_WHH2:R_WHH2 + H2, :4 * H2]               # (H2, 4H2)
    b2 = w_ref[R_B2:R_B2 + 1, :4 * H2]                       # (1, 4H2)
    w_fc = w_ref[R_WFC:R_WFC + H2, :OUT_PAD]                 # (H2, 128)
    b_fc = w_ref[R_BFC:R_BFC + 1, :OUT_PAD]                  # (1, 128)

    # ---- layer 1: input projection for BOTH directions in one matmul --------
    g1 = jnp.dot(x_ref[...], w_in,
                 preferred_element_type=jnp.float32) + b1    # (T*BP, 8H)

    # ---- layer 1: fused fwd+bwd recurrence, fully unrolled -------------------
    # State is [h_fwd | h_bwd] (BP, 2H); w_hh1 is block-diagonal so one matmul
    # advances both directions; step s processes fwd time s and bwd time T-1-s.
    h = jnp.zeros((BP, 2 * H), jnp.float32)
    c = jnp.zeros((BP, 2 * H), jnp.float32)
    yf = [None] * T
    yb = [None] * T
    for s in range(T):
        gates = g1[s * BP:(s + 1) * BP, :] + jnp.dot(
            h, w_hh1, preferred_element_type=jnp.float32)    # (BP, 8H)
        sg = jax.nn.sigmoid(gates[:, :6 * H])                # i|f|o, both dirs
        gg = jnp.tanh(gates[:, 6 * H:])                      # g, both dirs
        i = sg[:, :2 * H]
        f = sg[:, 2 * H:4 * H]
        o = sg[:, 4 * H:6 * H]
        c = f * c + i * gg
        h = o * jnp.tanh(c)
        yf[s] = h[:, :H]                 # forward output at time s
        yb[T - 1 - s] = h[:, H:]         # backward output at time T-1-s

    # Aligned (8-row) pieces: concat is pure vreg placement, no relayout.
    y1 = jnp.concatenate([jnp.concatenate(yf, axis=0),
                          jnp.concatenate(yb, axis=0)], axis=1)  # (T*BP, 2H)

    # ---- layer 2: hoisted input projection + unrolled recurrence -------------
    g2 = jnp.dot(y1, w_ih2, preferred_element_type=jnp.float32) + b2  # (T*BP,4H2)
    h2 = jnp.zeros((BP, H2), jnp.float32)
    c2 = jnp.zeros((BP, H2), jnp.float32)
    for t in range(T):
        gates = g2[t * BP:(t + 1) * BP, :] + jnp.dot(
            h2, w_hh2, preferred_element_type=jnp.float32)   # (BP, 4H2)
        sg = jax.nn.sigmoid(gates[:, :3 * H2])
        gg = jnp.tanh(gates[:, 3 * H2:])
        i = sg[:, :H2]
        f = sg[:, H2:2 * H2]
        o = sg[:, 2 * H2:3 * H2]
        c2 = f * c2 + i * gg
        h2 = o * jnp.tanh(c2)
    # h2 == hidden state at the last timestep (h_out_n[0]).

    # ---- FC head + stable log_softmax (lane-dense, padded cols biased -1e30) -
    logits = jnp.dot(h2, w_fc, preferred_element_type=jnp.float32) + b_fc
    m = jnp.max(logits, axis=-1, keepdims=True)
    shifted = logits - m
    lse = jnp.log(jnp.sum(jnp.exp(shifted), axis=-1, keepdims=True))
    out_ref[...] = shifted - lse


# -------------------------- parameter preparation ---------------------------
GATE_ORDER = ("i", "f", "o", "g")   # kernel gate order


def _pt_gate_blocks(a):
    """Split a PyTorch-layout (4H, ...) param into gate blocks i, f, g, o."""
    h = a.shape[0] // 4
    return {"i": a[0:h], "f": a[h:2 * h], "g": a[2 * h:3 * h], "o": a[3 * h:4 * h]}


def prepare_kernel_params(p):
    """One-time repack of PyTorch-layout params into the fused slab layout."""
    H, H2, E, C = LSTM_HIDDEN, LSTM_OUT_HIDDEN, EMB_SIZE, OUTPUT_CLASS

    wih_f = _pt_gate_blocks(p["w_ih_f"])
    wih_b = _pt_gate_blocks(p["w_ih_b"])
    whh_f = _pt_gate_blocks(p["w_hh_f"])
    whh_b = _pt_gate_blocks(p["w_hh_b"])
    b1f = _pt_gate_blocks(p["b_ih_f"] + p["b_hh_f"])
    b1b = _pt_gate_blocks(p["b_ih_b"] + p["b_hh_b"])

    # Fused layer-1 matrices: column order [i_f i_b | f_f f_b | o_f o_b | g_f g_b]
    w_in = jnp.zeros((2 * E, 8 * H), jnp.float32)
    w_hh1 = jnp.zeros((2 * H, 8 * H), jnp.float32)   # block-diagonal per direction
    b1 = jnp.zeros((8 * H,), jnp.float32)
    for k, name in enumerate(GATE_ORDER):
        cf = slice(2 * k * H, (2 * k + 1) * H)           # fwd-gate columns
        cb = slice((2 * k + 1) * H, (2 * k + 2) * H)     # bwd-gate columns
        w_in = w_in.at[0:E, cf].set(wih_f[name].T)
        w_in = w_in.at[E:2 * E, cb].set(wih_b[name].T)
        w_hh1 = w_hh1.at[0:H, cf].set(whh_f[name].T)
        w_hh1 = w_hh1.at[H:2 * H, cb].set(whh_b[name].T)
        b1 = b1.at[cf].set(b1f[name])
        b1 = b1.at[cb].set(b1b[name])

    # Layer 2 (unidirectional), kernel gate order [i, f, o, g]
    wih2 = _pt_gate_blocks(p["w_ih_o"])
    whh2 = _pt_gate_blocks(p["w_hh_o"])
    b2g = _pt_gate_blocks(p["b_ih_o"] + p["b_hh_o"])
    w_ih2 = jnp.concatenate([wih2[n] for n in GATE_ORDER], axis=0).T   # (2H, 4H2)
    w_hh2 = jnp.concatenate([whh2[n] for n in GATE_ORDER], axis=0).T   # (H2, 4H2)
    b2 = jnp.concatenate([b2g[n] for n in GATE_ORDER], axis=0)         # (4H2,)

    # FC head, padded lane-dense; padded logit columns get a -1e30 bias.
    w_fc_pad = jnp.zeros((H2, OUT_PAD), jnp.float32).at[:, :C].set(p["w_fc"].T)
    b_fc_pad = jnp.full((OUT_PAD,), -1e30, jnp.float32).at[:C].set(p["b_fc"])

    slab = jnp.zeros((SLAB_ROWS, SLAB_COLS), jnp.float32)
    slab = slab.at[R_WIN:R_WIN + 2 * E, :].set(w_in)
    slab = slab.at[R_WHH1:R_WHH1 + 2 * H, :].set(w_hh1)
    slab = slab.at[R_B1, :].set(b1)
    slab = slab.at[R_WIH2:R_WIH2 + 2 * H, 0:4 * H2].set(w_ih2)
    slab = slab.at[R_WHH2:R_WHH2 + H2, 0:4 * H2].set(w_hh2)
    slab = slab.at[R_B2, 0:4 * H2].set(b2)
    slab = slab.at[R_WFC:R_WFC + H2, 0:OUT_PAD].set(w_fc_pad)
    slab = slab.at[R_BFC, 0:OUT_PAD].set(b_fc_pad)

    return {"emb": p["emb"], "slab": slab}


# --------------------------------- forward ----------------------------------
@jax.jit
def my_model_forward(kp, tokens):
    """tokens: (B, T) int32 -> (B, OUTPUT_CLASS) log-probabilities."""
    B, T = tokens.shape
    # Pad batch to a full sublane tile; padded rows use token 0 (valid id) and
    # evolve independently, so real rows are untouched; sliced away at the end.
    tok_pad = jnp.zeros((BATCH_PAD, T), tokens.dtype).at[:B].set(tokens)

    # Build (T*BP, 2E) paired embeddings: per row [emb(time s) | emb(time T-1-s)]
    # so the fused fwd/bwd recurrence reads a single aligned row block per step.
    # TODO(synk): the gather stays as one XLA op inside this jit; in-kernel
    # fusion would need scalar-prefetch token indices + dynamic table row reads.
    tfm = jnp.transpose(tok_pad)                         # (T, BP) time-major
    idx_fwd = tfm.reshape(-1)
    idx_bwd = jnp.flip(tfm, axis=0).reshape(-1)
    idx = jnp.stack([idx_fwd, idx_bwd], axis=1).reshape(-1)
    x_pair = kp["emb"][idx].reshape(T * BATCH_PAD, 2 * EMB_SIZE)

    vmem = pl.BlockSpec(memory_space=pltpu.MemorySpace.VMEM)
    out_pad = pl.pallas_call(
        fused_model_kernel,
        out_shape=jax.ShapeDtypeStruct((BATCH_PAD, OUT_PAD), jnp.float32),
        in_specs=[vmem, vmem],
        out_specs=vmem,
    )(x_pair, kp["slab"])
    return out_pad[:B, :OUTPUT_CLASS]


# ------------------------------ initialization -------------------------------
def init_params(key):
    def uniform(key, shape, scale):
        return jax.random.uniform(key, shape, jnp.float32, -scale, scale)

    keys = jax.random.split(key, 16)
    k = 1.0 / jnp.sqrt(LSTM_HIDDEN)
    ko = 1.0 / jnp.sqrt(LSTM_OUT_HIDDEN)
    return {
        # embedding
        "emb": jax.random.normal(keys[0], (MAX_FEATURES, EMB_SIZE), jnp.float32),
        # first LSTM, forward direction (PyTorch layout, gate order i,f,g,o)
        "w_ih_f": uniform(keys[1], (4 * LSTM_HIDDEN, EMB_SIZE), k),
        "w_hh_f": uniform(keys[2], (4 * LSTM_HIDDEN, LSTM_HIDDEN), k),
        "b_ih_f": uniform(keys[3], (4 * LSTM_HIDDEN,), k),
        "b_hh_f": uniform(keys[4], (4 * LSTM_HIDDEN,), k),
        # first LSTM, backward direction
        "w_ih_b": uniform(keys[5], (4 * LSTM_HIDDEN, EMB_SIZE), k),
        "w_hh_b": uniform(keys[6], (4 * LSTM_HIDDEN, LSTM_HIDDEN), k),
        "b_ih_b": uniform(keys[7], (4 * LSTM_HIDDEN,), k),
        "b_hh_b": uniform(keys[8], (4 * LSTM_HIDDEN,), k),
        # second LSTM (unidirectional), input = 2*LSTM_HIDDEN
        "w_ih_o": uniform(keys[9], (4 * LSTM_OUT_HIDDEN, 2 * LSTM_HIDDEN), ko),
        "w_hh_o": uniform(keys[10], (4 * LSTM_OUT_HIDDEN, LSTM_OUT_HIDDEN), ko),
        "b_ih_o": uniform(keys[11], (4 * LSTM_OUT_HIDDEN,), ko),
        "b_hh_o": uniform(keys[12], (4 * LSTM_OUT_HIDDEN,), ko),
        # final linear
        "w_fc": uniform(keys[13], (OUTPUT_CLASS, LSTM_OUT_HIDDEN),
                        1.0 / jnp.sqrt(LSTM_OUT_HIDDEN)),
        "b_fc": uniform(keys[14], (OUTPUT_CLASS,),
                        1.0 / jnp.sqrt(LSTM_OUT_HIDDEN)),
    }


# ---------------------------- pure-JAX reference -----------------------------
def _ref_lstm(x_tbe, w_ih, w_hh, b_ih, b_hh, reverse=False):
    T, B, _ = x_tbe.shape
    H = w_hh.shape[1]

    def step(carry, xt):
        h, c = carry
        gates = xt @ w_ih.T + h @ w_hh.T + b_ih + b_hh
        i = jax.nn.sigmoid(gates[:, :H])
        f = jax.nn.sigmoid(gates[:, H:2 * H])
        g = jnp.tanh(gates[:, 2 * H:3 * H])
        o = jax.nn.sigmoid(gates[:, 3 * H:])
        c = f * c + i * g
        h = o * jnp.tanh(c)
        return (h, c), h

    init = (jnp.zeros((B, H), jnp.float32), jnp.zeros((B, H), jnp.float32))
    xs = jnp.flip(x_tbe, 0) if reverse else x_tbe
    _, ys = jax.lax.scan(step, init, xs)
    return jnp.flip(ys, 0) if reverse else ys


def reference_forward(p, tokens):
    x = p["emb"][tokens]                                   # (B, T, E)
    x = jnp.transpose(x, (1, 0, 2))                        # (T, B, E)
    yf = _ref_lstm(x, p["w_ih_f"], p["w_hh_f"], p["b_ih_f"], p["b_hh_f"])
    yb = _ref_lstm(x, p["w_ih_b"], p["w_hh_b"], p["b_ih_b"], p["b_hh_b"],
                   reverse=True)
    y1 = jnp.concatenate([yf, yb], axis=-1)
    y2 = _ref_lstm(y1, p["w_ih_o"], p["w_hh_o"], p["b_ih_o"], p["b_hh_o"])
    logits = y2[-1] @ p["w_fc"].T + p["b_fc"]
    return jax.nn.log_softmax(logits, axis=-1)


if __name__ == "__main__":
    key = jax.random.PRNGKey(0)
    pkey, tkey = jax.random.split(key)
    params = init_params(pkey)
    kparams = prepare_kernel_params(params)   # one-time weight repack
    tokens = jax.random.randint(tkey, (BATCH, SEQ), 0, MAX_FEATURES, jnp.int32)

    out = my_model_forward(kparams, tokens)
    out = jax.block_until_ready(out)

    assert out.shape == (BATCH, OUTPUT_CLASS)
    # log_softmax rows should (approximately) exponentiate-sum to 1.
    row_sums = jnp.exp(out).sum(axis=-1)
    assert bool(jnp.all(jnp.abs(row_sums - 1.0) < 1e-4))
    # Match the pure-JAX (PyTorch-semantics) reference.
    ref = reference_forward(params, tokens)
    assert bool(jnp.allclose(out, ref, atol=1e-4, rtol=1e-4))
    print("KERNEL_OK")
</pallas_src>

<mosaic_0001>
module attributes {stable_mosaic.version = 11 : i64} {
  func.func @fused_model_kernel(%arg0: memref<64x64xf32, #tpu.memory_space<vmem>>, %arg1: memref<280x256xf32, #tpu.memory_space<vmem>>, %arg2: memref<8x128xf32, #tpu.memory_space<vmem>>) attributes {dimension_semantics = [], scalar_prefetch = 0 : i64, scratch_operands = 0 : i64, tpu.core_type = #tpu.core_type<tc>} {
    %c0 = arith.constant 0 : index
    %c0_0 = arith.constant 0 : index
    %0 = vector.load %arg1[%c0, %c0_0] : memref<280x256xf32, #tpu.memory_space<vmem>>, vector<64x256xf32>
    %c64 = arith.constant 64 : index
    %c0_1 = arith.constant 0 : index
    %1 = vector.load %arg1[%c64, %c0_1] : memref<280x256xf32, #tpu.memory_space<vmem>>, vector<64x256xf32>
    %c128 = arith.constant 128 : index
    %c0_2 = arith.constant 0 : index
    %2 = vector.load %arg1[%c128, %c0_2] : memref<280x256xf32, #tpu.memory_space<vmem>>, vector<1x256xf32>
    %c136 = arith.constant 136 : index
    %c0_3 = arith.constant 0 : index
    %3 = vector.load %arg1[%c136, %c0_3] : memref<280x256xf32, #tpu.memory_space<vmem>>, vector<64x128xf32>
    %c200 = arith.constant 200 : index
    %c0_4 = arith.constant 0 : index
    %4 = vector.load %arg1[%c200, %c0_4] : memref<280x256xf32, #tpu.memory_space<vmem>>, vector<32x128xf32>
    %c232 = arith.constant 232 : index
    %c0_5 = arith.constant 0 : index
    %5 = vector.load %arg1[%c232, %c0_5] : memref<280x256xf32, #tpu.memory_space<vmem>>, vector<1x128xf32>
    %c240 = arith.constant 240 : index
    %c0_6 = arith.constant 0 : index
    %6 = vector.load %arg1[%c240, %c0_6] : memref<280x256xf32, #tpu.memory_space<vmem>>, vector<32x128xf32>
    %c272 = arith.constant 272 : index
    %c0_7 = arith.constant 0 : index
    %7 = vector.load %arg1[%c272, %c0_7] : memref<280x256xf32, #tpu.memory_space<vmem>>, vector<1x128xf32>
    %c0_8 = arith.constant 0 : index
    %c0_9 = arith.constant 0 : index
    %8 = vector.load %arg0[%c0_8, %c0_9] : memref<64x64xf32, #tpu.memory_space<vmem>>, vector<64x64xf32>
    %cst = arith.constant dense<0.000000e+00> : vector<64x256xf32>
    %9 = tpu.matmul %8, %0, %cst {dimension_numbers = #tpu.dot_dimension_numbers<[1], [0], [0], [1], [0, 0, 1, 1], [], []>} : vector<64x64xf32>, vector<64x256xf32>, vector<64x256xf32> -> vector<64x256xf32>
    %10 = vector.broadcast %2 : vector<1x256xf32> to vector<64x256xf32>
    %11 = arith.addf %9, %10 : vector<64x256xf32>
    %cst_10 = arith.constant 0.000000e+00 : f32
    %12 = vector.broadcast %cst_10 : f32 to vector<8x64xf32>
    %cst_11 = arith.constant 0.000000e+00 : f32
    %13 = vector.broadcast %cst_11 : f32 to vector<8x64xf32>
    %14 = vector.extract_strided_slice %11 {offsets = [0, 0], sizes = [8, 256], strides = [1, 1]} : vector<64x256xf32> to vector<8x256xf32>
    %cst_12 = arith.constant dense<0.000000e+00> : vector<8x256xf32>
    %15 = tpu.matmul %12, %1, %cst_12 {dimension_numbers = #tpu.dot_dimension_numbers<[1], [0], [0], [1], [0, 0, 1, 1], [], []>} : vector<8x64xf32>, vector<64x256xf32>, vector<8x256xf32> -> vector<8x256xf32>
    %16 = arith.addf %14, %15 : vector<8x256xf32>
    %17 = vector.extract_strided_slice %16 {offsets = [0, 0], sizes = [8, 192], strides = [1, 1]} : vector<8x256xf32> to vector<8x192xf32>
    %18 = arith.negf %17 : vector<8x192xf32>
    %19 = math.exp %18 : vector<8x192xf32>
    %cst_13 = arith.constant 1.000000e+00 : f32
    %20 = vector.broadcast %cst_13 : f32 to vector<8x192xf32>
    %21 = arith.addf %20, %19 : vector<8x192xf32>
    %22 = arith.divf %20, %21 : vector<8x192xf32>
    %23 = vector.extract_strided_slice %16 {offsets = [0, 192], sizes = [8, 64], strides = [1, 1]} : vector<8x256xf32> to vector<8x64xf32>
    %24 = math.tanh %23 : vector<8x64xf32>
    %25 = vector.extract_strided_slice %22 {offsets = [0, 0], sizes = [8, 64], strides = [1, 1]} : vector<8x192xf32> to vector<8x64xf32>
    %26 = vector.extract_strided_slice %22 {offsets = [0, 64], sizes = [8, 64], strides = [1, 1]} : vector<8x192xf32> to vector<8x64xf32>
    %27 = vector.extract_strided_slice %22 {offsets = [0, 128], sizes = [8, 64], strides = [1, 1]} : vector<8x192xf32> to vector<8x64xf32>
    %28 = arith.mulf %26, %13 : vector<8x64xf32>
    %29 = arith.mulf %25, %24 : vector<8x64xf32>
    %30 = arith.addf %28, %29 : vector<8x64xf32>
    %31 = math.tanh %30 : vector<8x64xf32>
    %32 = arith.mulf %27, %31 : vector<8x64xf32>
    %33 = vector.extract_strided_slice %32 {offsets = [0, 0], sizes = [8, 32], strides = [1, 1]} : vector<8x64xf32> to vector<8x32xf32>
    %34 = vector.extract_strided_slice %32 {offsets = [0, 32], sizes = [8, 32], strides = [1, 1]} : vector<8x64xf32> to vector<8x32xf32>
    %35 = vector.extract_strided_slice %11 {offsets = [8, 0], sizes = [8, 256], strides = [1, 1]} : vector<64x256xf32> to vector<8x256xf32>
    %cst_14 = arith.constant dense<0.000000e+00> : vector<8x256xf32>
    %36 = tpu.matmul %32, %1, %cst_14 {dimension_numbers = #tpu.dot_dimension_numbers<[1], [0], [0], [1], [0, 0, 1, 1], [], []>} : vector<8x64xf32>, vector<64x256xf32>, vector<8x256xf32> -> vector<8x256xf32>
    %37 = arith.addf %35, %36 : vector<8x256xf32>
    %38 = vector.extract_strided_slice %37 {offsets = [0, 0], sizes = [8, 192], strides = [1, 1]} : vector<8x256xf32> to vector<8x192xf32>
    %39 = arith.negf %38 : vector<8x192xf32>
    %40 = math.exp %39 : vector<8x192xf32>
    %cst_15 = arith.constant 1.000000e+00 : f32
    %41 = vector.broadcast %cst_15 : f32 to vector<8x192xf32>
    %42 = arith.addf %41, %40 : vector<8x192xf32>
    %43 = arith.divf %41, %42 : vector<8x192xf32>
    %44 = vector.extract_strided_slice %37 {offsets = [0, 192], sizes = [8, 64], strides = [1, 1]} : vector<8x256xf32> to vector<8x64xf32>
    %45 = math.tanh %44 : vector<8x64xf32>
    %46 = vector.extract_strided_slice %43 {offsets = [0, 0], sizes = [8, 64], strides = [1, 1]} : vector<8x192xf32> to vector<8x64xf32>
    %47 = vector.extract_strided_slice %43 {offsets = [0, 64], sizes = [8, 64], strides = [1, 1]} : vector<8x192xf32> to vector<8x64xf32>
    %48 = vector.extract_strided_slice %43 {offsets = [0, 128], sizes = [8, 64], strides = [1, 1]} : vector<8x192xf32> to vector<8x64xf32>
    %49 = arith.mulf %47, %30 : vector<8x64xf32>
    %50 = arith.mulf %46, %45 : vector<8x64xf32>
    %51 = arith.addf %49, %50 : vector<8x64xf32>
    %52 = math.tanh %51 : vector<8x64xf32>
    %53 = arith.mulf %48, %52 : vector<8x64xf32>
    %54 = vector.extract_strided_slice %53 {offsets = [0, 0], sizes = [8, 32], strides = [1, 1]} : vector<8x64xf32> to vector<8x32xf32>
    %55 = vector.extract_strided_slice %53 {offsets = [0, 32], sizes = [8, 32], strides = [1, 1]} : vector<8x64xf32> to vector<8x32xf32>
    %56 = vector.extract_strided_slice %11 {offsets = [16, 0], sizes = [8, 256], strides = [1, 1]} : vector<64x256xf32> to vector<8x256xf32>
    %cst_16 = arith.constant dense<0.000000e+00> : vector<8x256xf32>
    %57 = tpu.matmul %53, %1, %cst_16 {dimension_numbers = #tpu.dot_dimension_numbers<[1], [0], [0], [1], [0, 0, 1, 1], [], []>} : vector<8x64xf32>, vector<64x256xf32>, vector<8x256xf32> -> vector<8x256xf32>
    %58 = arith.addf %56, %57 : vector<8x256xf32>
    %59 = vector.extract_strided_slice %58 {offsets = [0, 0], sizes = [8, 192], strides = [1, 1]} : vector<8x256xf32> to vector<8x192xf32>
    %60 = arith.negf %59 : vector<8x192xf32>
    %61 = math.exp %60 : vector<8x192xf32>
    %cst_17 = arith.constant 1.000000e+00 : f32
    %62 = vector.broadcast %cst_17 : f32 to vector<8x192xf32>
    %63 = arith.addf %62, %61 : vector<8x192xf32>
    %64 = arith.divf %62, %63 : vector<8x192xf32>
    %65 = vector.extract_strided_slice %58 {offsets = [0, 192], sizes = [8, 64], strides = [1, 1]} : vector<8x256xf32> to vector<8x64xf32>
    %66 = math.tanh %65 : vector<8x64xf32>
    %67 = vector.extract_strided_slice %64 {offsets = [0, 0], sizes = [8, 64], strides = [1, 1]} : vector<8x192xf32> to vector<8x64xf32>
    %68 = vector.extract_strided_slice %64 {offsets = [0, 64], sizes = [8, 64], strides = [1, 1]} : vector<8x192xf32> to vector<8x64xf32>
    %69 = vector.extract_strided_slice %64 {offsets = [0, 128], sizes = [8, 64], strides = [1, 1]} : vector<8x192xf32> to vector<8x64xf32>
    %70 = arith.mulf %68, %51 : vector<8x64xf32>
    %71 = arith.mulf %67, %66 : vector<8x64xf32>
    %72 = arith.addf %70, %71 : vector<8x64xf32>
    %73 = math.tanh %72 : vector<8x64xf32>
    %74 = arith.mulf %69, %73 : vector<8x64xf32>
    %75 = vector.extract_strided_slice %74 {offsets = [0, 0], sizes = [8, 32], strides = [1, 1]} : vector<8x64xf32> to vector<8x32xf32>
    %76 = vector.extract_strided_slice %74 {offsets = [0, 32], sizes = [8, 32], strides = [1, 1]} : vector<8x64xf32> to vector<8x32xf32>
    %77 = vector.extract_strided_slice %11 {offsets = [24, 0], sizes = [8, 256], strides = [1, 1]} : vector<64x256xf32> to vector<8x256xf32>
    %cst_18 = arith.constant dense<0.000000e+00> : vector<8x256xf32>
    %78 = tpu.matmul %74, %1, %cst_18 {dimension_numbers = #tpu.dot_dimension_numbers<[1], [0], [0], [1], [0, 0, 1, 1], [], []>} : vector<8x64xf32>, vector<64x256xf32>, vector<8x256xf32> -> vector<8x256xf32>
    %79 = arith.addf %77, %78 : vector<8x256xf32>
    %80 = vector.extract_strided_slice %79 {offsets = [0, 0], sizes = [8, 192], strides = [1, 1]} : vector<8x256xf32> to vector<8x192xf32>
    %81 = arith.negf %80 : vector<8x192xf32>
    %82 = math.exp %81 : vector<8x192xf32>
    %cst_19 = arith.constant 1.000000e+00 : f32
    %83 = vector.broadcast %cst_19 : f32 to vector<8x192xf32>
    %84 = arith.addf %83, %82 : vector<8x192xf32>
    %85 = arith.divf %83, %84 : vector<8x192xf32>
    %86 = vector.extract_strided_slice %79 {offsets = [0, 192], sizes = [8, 64], strides = [1, 1]} : vector<8x256xf32> to vector<8x64xf32>
    %87 = math.tanh %86 : vector<8x64xf32>
    %88 = vector.extract_strided_slice %85 {offsets = [0, 0], sizes = [8, 64], strides = [1, 1]} : vector<8x192xf32> to vector<8x64xf32>
    %89 = vector.extract_strided_slice %85 {offsets = [0, 64], sizes = [8, 64], strides = [1, 1]} : vector<8x192xf32> to vector<8x64xf32>
    %90 = vector.extract_strided_slice %85 {offsets = [0, 128], sizes = [8, 64], strides = [1, 1]} : vector<8x192xf32> to vector<8x64xf32>
    %91 = arith.mulf %89, %72 : vector<8x64xf32>
    %92 = arith.mulf %88, %87 : vector<8x64xf32>
    %93 = arith.addf %91, %92 : vector<8x64xf32>
    %94 = math.tanh %93 : vector<8x64xf32>
    %95 = arith.mulf %90, %94 : vector<8x64xf32>
    %96 = vector.extract_strided_slice %95 {offsets = [0, 0], sizes = [8, 32], strides = [1, 1]} : vector<8x64xf32> to vector<8x32xf32>
    %97 = vector.extract_strided_slice %95 {offsets = [0, 32], sizes = [8, 32], strides = [1, 1]} : vector<8x64xf32> to vector<8x32xf32>
    %98 = vector.extract_strided_slice %11 {offsets = [32, 0], sizes = [8, 256], strides = [1, 1]} : vector<64x256xf32> to vector<8x256xf32>
    %cst_20 = arith.constant dense<0.000000e+00> : vector<8x256xf32>
    %99 = tpu.matmul %95, %1, %cst_20 {dimension_numbers = #tpu.dot_dimension_numbers<[1], [0], [0], [1], [0, 0, 1, 1], [], []>} : vector<8x64xf32>, vector<64x256xf32>, vector<8x256xf32> -> vector<8x256xf32>
    %100 = arith.addf %98, %99 : vector<8x256xf32>
    %101 = vector.extract_strided_slice %100 {offsets = [0, 0], sizes = [8, 192], strides = [1, 1]} : vector<8x256xf32> to vector<8x192xf32>
    %102 = arith.negf %101 : vector<8x192xf32>
    %103 = math.exp %102 : vector<8x192xf32>
    %cst_21 = arith.constant 1.000000e+00 : f32
    %104 = vector.broadcast %cst_21 : f32 to vector<8x192xf32>
    %105 = arith.addf %104, %103 : vector<8x192xf32>
    %106 = arith.divf %104, %105 : vector<8x192xf32>
    %107 = vector.extract_strided_slice %100 {offsets = [0, 192], sizes = [8, 64], strides = [1, 1]} : vector<8x256xf32> to vector<8x64xf32>
    %108 = math.tanh %107 : vector<8x64xf32>
    %109 = vector.extract_strided_slice %106 {offsets = [0, 0], sizes = [8, 64], strides = [1, 1]} : vector<8x192xf32> to vector<8x64xf32>
    %110 = vector.extract_strided_slice %106 {offsets = [0, 64], sizes = [8, 64], strides = [1, 1]} : vector<8x192xf32> to vector<8x64xf32>
    %111 = vector.extract_strided_slice %106 {offsets = [0, 128], sizes = [8, 64], strides = [1, 1]} : vector<8x192xf32> to vector<8x64xf32>
    %112 = arith.mulf %110, %93 : vector<8x64xf32>
    %113 = arith.mulf %109, %108 : vector<8x64xf32>
    %114 = arith.addf %112, %113 : vector<8x64xf32>
    %115 = math.tanh %114 : vector<8x64xf32>
    %116 = arith.mulf %111, %115 : vector<8x64xf32>
    %117 = vector.extract_strided_slice %116 {offsets = [0, 0], sizes = [8, 32], strides = [1, 1]} : vector<8x64xf32> to vector<8x32xf32>
    %118 = vector.extract_strided_slice %116 {offsets = [0, 32], sizes = [8, 32], strides = [1, 1]} : vector<8x64xf32> to vector<8x32xf32>
    %119 = vector.extract_strided_slice %11 {offsets = [40, 0], sizes = [8, 256], strides = [1, 1]} : vector<64x256xf32> to vector<8x256xf32>
    %cst_22 = arith.constant dense<0.000000e+00> : vector<8x256xf32>
    %120 = tpu.matmul %116, %1, %cst_22 {dimension_numbers = #tpu.dot_dimension_numbers<[1], [0], [0], [1], [0, 0, 1, 1], [], []>} : vector<8x64xf32>, vector<64x256xf32>, vector<8x256xf32> -> vector<8x256xf32>
    %121 = arith.addf %119, %120 : vector<8x256xf32>
    %122 = vector.extract_strided_slice %121 {offsets = [0, 0], sizes = [8, 192], strides = [1, 1]} : vector<8x256xf32> to vector<8x192xf32>
    %123 = arith.negf %122 : vector<8x192xf32>
    %124 = math.exp %123 : vector<8x192xf32>
    %cst_23 = arith.constant 1.000000e+00 : f32
    %125 = vector.broadcast %cst_23 : f32 to vector<8x192xf32>
    %126 = arith.addf %125, %124 : vector<8x192xf32>
    %127 = arith.divf %125, %126 : vector<8x192xf32>
    %128 = vector.extract_strided_slice %121 {offsets = [0, 192], sizes = [8, 64], strides = [1, 1]} : vector<8x256xf32> to vector<8x64xf32>
    %129 = math.tanh %128 : vector<8x64xf32>
    %130 = vector.extract_strided_slice %127 {offsets = [0, 0], sizes = [8, 64], strides = [1, 1]} : vector<8x192xf32> to vector<8x64xf32>
    %131 = vector.extract_strided_slice %127 {offsets = [0, 64], sizes = [8, 64], strides = [1, 1]} : vector<8x192xf32> to vector<8x64xf32>
    %132 = vector.extract_strided_slice %127 {offsets = [0, 128], sizes = [8, 64], strides = [1, 1]} : vector<8x192xf32> to vector<8x64xf32>
    %133 = arith.mulf %131, %114 : vector<8x64xf32>
    %134 = arith.mulf %130, %129 : vector<8x64xf32>
    %135 = arith.addf %133, %134 : vector<8x64xf32>
    %136 = math.tanh %135 : vector<8x64xf32>
    %137 = arith.mulf %132, %136 : vector<8x64xf32>
    %138 = vector.extract_strided_slice %137 {offsets = [0, 0], sizes = [8, 32], strides = [1, 1]} : vector<8x64xf32> to vector<8x32xf32>
    %139 = vector.extract_strided_slice %137 {offsets = [0, 32], sizes = [8, 32], strides = [1, 1]} : vector<8x64xf32> to vector<8x32xf32>
    %140 = vector.extract_strided_slice %11 {offsets = [48, 0], sizes = [8, 256], strides = [1, 1]} : vector<64x256xf32> to vector<8x256xf32>
    %cst_24 = arith.constant dense<0.000000e+00> : vector<8x256xf32>
    %141 = tpu.matmul %137, %1, %cst_24 {dimension_numbers = #tpu.dot_dimension_numbers<[1], [0], [0], [1], [0, 0, 1, 1], [], []>} : vector<8x64xf32>, vector<64x256xf32>, vector<8x256xf32> -> vector<8x256xf32>
    %142 = arith.addf %140, %141 : vector<8x256xf32>
    %143 = vector.extract_strided_slice %142 {offsets = [0, 0], sizes = [8, 192], strides = [1, 1]} : vector<8x256xf32> to vector<8x192xf32>
    %144 = arith.negf %143 : vector<8x192xf32>
    %145 = math.exp %144 : vector<8x192xf32>
    %cst_25 = arith.constant 1.000000e+00 : f32
    %146 = vector.broadcast %cst_25 : f32 to vector<8x192xf32>
    %147 = arith.addf %146, %145 : vector<8x192xf32>
    %148 = arith.divf %146, %147 : vector<8x192xf32>
    %149 = vector.extract_strided_slice %142 {offsets = [0, 192], sizes = [8, 64], strides = [1, 1]} : vector<8x256xf32> to vector<8x64xf32>
    %150 = math.tanh %149 : vector<8x64xf32>
    %151 = vector.extract_strided_slice %148 {offsets = [0, 0], sizes = [8, 64], strides = [1, 1]} : vector<8x192xf32> to vector<8x64xf32>
    %152 = vector.extract_strided_slice %148 {offsets = [0, 64], sizes = [8, 64], strides = [1, 1]} : vector<8x192xf32> to vector<8x64xf32>
    %153 = vector.extract_strided_slice %148 {offsets = [0, 128], sizes = [8, 64], strides = [1, 1]} : vector<8x192xf32> to vector<8x64xf32>
    %154 = arith.mulf %152, %135 : vector<8x64xf32>
    %155 = arith.mulf %151, %150 : vector<8x64xf32>
    %156 = arith.addf %154, %155 : vector<8x64xf32>
    %157 = math.tanh %156 : vector<8x64xf32>
    %158 = arith.mulf %153, %157 : vector<8x64xf32>
    %159 = vector.extract_strided_slice %158 {offsets = [0, 0], sizes = [8, 32], strides = [1, 1]} : vector<8x64xf32> to vector<8x32xf32>
    %160 = vector.extract_strided_slice %158 {offsets = [0, 32], sizes = [8, 32], strides = [1, 1]} : vector<8x64xf32> to vector<8x32xf32>
    %161 = vector.extract_strided_slice %11 {offsets = [56, 0], sizes = [8, 256], strides = [1, 1]} : vector<64x256xf32> to vector<8x256xf32>
    %cst_26 = arith.constant dense<0.000000e+00> : vector<8x256xf32>
    %162 = tpu.matmul %158, %1, %cst_26 {dimension_numbers = #tpu.dot_dimension_numbers<[1], [0], [0], [1], [0, 0, 1, 1], [], []>} : vector<8x64xf32>, vector<64x256xf32>, vector<8x256xf32> -> vector<8x256xf32>
    %163 = arith.addf %161, %162 : vector<8x256xf32>
    %164 = vector.extract_strided_slice %163 {offsets = [0, 0], sizes = [8, 192], strides = [1, 1]} : vector<8x256xf32> to vector<8x192xf32>
    %165 = arith.negf %164 : vector<8x192xf32>
    %166 = math.exp %165 : vector<8x192xf32>
    %cst_27 = arith.constant 1.000000e+00 : f32
    %167 = vector.broadcast %cst_27 : f32 to vector<8x192xf32>
    %168 = arith.addf %167, %166 : vector<8x192xf32>
    %169 = arith.divf %167, %168 : vector<8x192xf32>
    %170 = vector.extract_strided_slice %163 {offsets = [0, 192], sizes = [8, 64], strides = [1, 1]} : vector<8x256xf32> to vector<8x64xf32>
    %171 = math.tanh %170 : vector<8x64xf32>
    %172 = vector.extract_strided_slice %169 {offsets = [0, 0], sizes = [8, 64], strides = [1, 1]} : vector<8x192xf32> to vector<8x64xf32>
    %173 = vector.extract_strided_slice %169 {offsets = [0, 64], sizes = [8, 64], strides = [1, 1]} : vector<8x192xf32> to vector<8x64xf32>
    %174 = vector.extract_strided_slice %169 {offsets = [0, 128], sizes = [8, 64], strides = [1, 1]} : vector<8x192xf32> to vector<8x64xf32>
    %175 = arith.mulf %173, %156 : vector<8x64xf32>
    %176 = arith.mulf %172, %171 : vector<8x64xf32>
    %177 = arith.addf %175, %176 : vector<8x64xf32>
    %178 = math.tanh %177 : vector<8x64xf32>
    %179 = arith.mulf %174, %178 : vector<8x64xf32>
    %180 = vector.extract_strided_slice %179 {offsets = [0, 0], sizes = [8, 32], strides = [1, 1]} : vector<8x64xf32> to vector<8x32xf32>
    %181 = vector.extract_strided_slice %179 {offsets = [0, 32], sizes = [8, 32], strides = [1, 1]} : vector<8x64xf32> to vector<8x32xf32>
    %182 = tpu.concatenate %33, %54, %75, %96, %117, %138, %159, %180 in 0 : vector<8x32xf32>, vector<8x32xf32>, vector<8x32xf32>, vector<8x32xf32>, vector<8x32xf32>, vector<8x32xf32>, vector<8x32xf32>, vector<8x32xf32> -> vector<64x32xf32>
    %183 = tpu.concatenate %181, %160, %139, %118, %97, %76, %55, %34 in 0 : vector<8x32xf32>, vector<8x32xf32>, vector<8x32xf32>, vector<8x32xf32>, vector<8x32xf32>, vector<8x32xf32>, vector<8x32xf32>, vector<8x32xf32> -> vector<64x32xf32>
    %184 = tpu.concatenate %182, %183 in 1 : vector<64x32xf32>, vector<64x32xf32> -> vector<64x64xf32>
    %cst_28 = arith.constant dense<0.000000e+00> : vector<64x128xf32>
    %185 = tpu.matmul %184, %3, %cst_28 {dimension_numbers = #tpu.dot_dimension_numbers<[1], [0], [0], [1], [0, 0, 1, 1], [], []>} : vector<64x64xf32>, vector<64x128xf32>, vector<64x128xf32> -> vector<64x128xf32>
    %186 = vector.broadcast %5 : vector<1x128xf32> to vector<64x128xf32>
    %187 = arith.addf %185, %186 : vector<64x128xf32>
    %cst_29 = arith.constant 0.000000e+00 : f32
    %188 = vector.broadcast %cst_29 : f32 to vector<8x32xf32>
    %cst_30 = arith.constant 0.000000e+00 : f32
    %189 = vector.broadcast %cst_30 : f32 to vector<8x32xf32>
    %190 = vector.extract_strided_slice %187 {offsets = [0, 0], sizes = [8, 128], strides = [1, 1]} : vector<64x128xf32> to vector<8x128xf32>
    %cst_31 = arith.constant dense<0.000000e+00> : vector<8x128xf32>
    %191 = tpu.matmul %188, %4, %cst_31 {dimension_numbers = #tpu.dot_dimension_numbers<[1], [0], [0], [1], [0, 0, 1, 1], [], []>} : vector<8x32xf32>, vector<32x128xf32>, vector<8x128xf32> -> vector<8x128xf32>
    %192 = arith.addf %190, %191 : vector<8x128xf32>
    %193 = vector.extract_strided_slice %192 {offsets = [0, 0], sizes = [8, 96], strides = [1, 1]} : vector<8x128xf32> to vector<8x96xf32>
    %194 = arith.negf %193 : vector<8x96xf32>
    %195 = math.exp %194 : vector<8x96xf32>
    %cst_32 = arith.constant 1.000000e+00 : f32
    %196 = vector.broadcast %cst_32 : f32 to vector<8x96xf32>
    %197 = arith.addf %196, %195 : vector<8x96xf32>
    %198 = arith.divf %196, %197 : vector<8x96xf32>
    %199 = vector.extract_strided_slice %192 {offsets = [0, 96], sizes = [8, 32], strides = [1, 1]} : vector<8x128xf32> to vector<8x32xf32>
    %200 = math.tanh %199 : vector<8x32xf32>
    %201 = vector.extract_strided_slice %198 {offsets = [0, 0], sizes = [8, 32], strides = [1, 1]} : vector<8x96xf32> to vector<8x32xf32>
    %202 = vector.extract_strided_slice %198 {offsets = [0, 32], sizes = [8, 32], strides = [1, 1]} : vector<8x96xf32> to vector<8x32xf32>
    %203 = vector.extract_strided_slice %198 {offsets = [0, 64], sizes = [8, 32], strides = [1, 1]} : vector<8x96xf32> to vector<8x32xf32>
    %204 = arith.mulf %202, %189 : vector<8x32xf32>
    %205 = arith.mulf %201, %200 : vector<8x32xf32>
    %206 = arith.addf %204, %205 : vector<8x32xf32>
    %207 = math.tanh %206 : vector<8x32xf32>
    %208 = arith.mulf %203, %207 : vector<8x32xf32>
    %209 = vector.extract_strided_slice %187 {offsets = [8, 0], sizes = [8, 128], strides = [1, 1]} : vector<64x128xf32> to vector<8x128xf32>
    %cst_33 = arith.constant dense<0.000000e+00> : vector<8x128xf32>
    %210 = tpu.matmul %208, %4, %cst_33 {dimension_numbers = #tpu.dot_dimension_numbers<[1], [0], [0], [1], [0, 0, 1, 1], [], []>} : vector<8x32xf32>, vector<32x128xf32>, vector<8x128xf32> -> vector<8x128xf32>
    %211 = arith.addf %209, %210 : vector<8x128xf32>
    %212 = vector.extract_strided_slice %211 {offsets = [0, 0], sizes = [8, 96], strides = [1, 1]} : vector<8x128xf32> to vector<8x96xf32>
    %213 = arith.negf %212 : vector<8x96xf32>
    %214 = math.exp %213 : vector<8x96xf32>
    %cst_34 = arith.constant 1.000000e+00 : f32
    %215 = vector.broadcast %cst_34 : f32 to vector<8x96xf32>
    %216 = arith.addf %215, %214 : vector<8x96xf32>
    %217 = arith.divf %215, %216 : vector<8x96xf32>
    %218 = vector.extract_strided_slice %211 {offsets = [0, 96], sizes = [8, 32], strides = [1, 1]} : vector<8x128xf32> to vector<8x32xf32>
    %219 = math.tanh %218 : vector<8x32xf32>
    %220 = vector.extract_strided_slice %217 {offsets = [0, 0], sizes = [8, 32], strides = [1, 1]} : vector<8x96xf32> to vector<8x32xf32>
    %221 = vector.extract_strided_slice %217 {offsets = [0, 32], sizes = [8, 32], strides = [1, 1]} : vector<8x96xf32> to vector<8x32xf32>
    %222 = vector.extract_strided_slice %217 {offsets = [0, 64], sizes = [8, 32], strides = [1, 1]} : vector<8x96xf32> to vector<8x32xf32>
    %223 = arith.mulf %221, %206 : vector<8x32xf32>
    %224 = arith.mulf %220, %219 : vector<8x32xf32>
    %225 = arith.addf %223, %224 : vector<8x32xf32>
    %226 = math.tanh %225 : vector<8x32xf32>
    %227 = arith.mulf %222, %226 : vector<8x32xf32>
    %228 = vector.extract_strided_slice %187 {offsets = [16, 0], sizes = [8, 128], strides = [1, 1]} : vector<64x128xf32> to vector<8x128xf32>
    %cst_35 = arith.constant dense<0.000000e+00> : vector<8x128xf32>
    %229 = tpu.matmul %227, %4, %cst_35 {dimension_numbers = #tpu.dot_dimension_numbers<[1], [0], [0], [1], [0, 0, 1, 1], [], []>} : vector<8x32xf32>, vector<32x128xf32>, vector<8x128xf32> -> vector<8x128xf32>
    %230 = arith.addf %228, %229 : vector<8x128xf32>
    %231 = vector.extract_strided_slice %230 {offsets = [0, 0], sizes = [8, 96], strides = [1, 1]} : vector<8x128xf32> to vector<8x96xf32>
    %232 = arith.negf %231 : vector<8x96xf32>
    %233 = math.exp %232 : vector<8x96xf32>
    %cst_36 = arith.constant 1.000000e+00 : f32
    %234 = vector.broadcast %cst_36 : f32 to vector<8x96xf32>
    %235 = arith.addf %234, %233 : vector<8x96xf32>
    %236 = arith.divf %234, %235 : vector<8x96xf32>
    %237 = vector.extract_strided_slice %230 {offsets = [0, 96], sizes = [8, 32], strides = [1, 1]} : vector<8x128xf32> to vector<8x32xf32>
    %238 = math.tanh %237 : vector<8x32xf32>
    %239 = vector.extract_strided_slice %236 {offsets = [0, 0], sizes = [8, 32], strides = [1, 1]} : vector<8x96xf32> to vector<8x32xf32>
    %240 = vector.extract_strided_slice %236 {offsets = [0, 32], sizes = [8, 32], strides = [1, 1]} : vector<8x96xf32> to vector<8x32xf32>
    %241 = vector.extract_strided_slice %236 {offsets = [0, 64], sizes = [8, 32], strides = [1, 1]} : vector<8x96xf32> to vector<8x32xf32>
    %242 = arith.mulf %240, %225 : vector<8x32xf32>
    %243 = arith.mulf %239, %238 : vector<8x32xf32>
    %244 = arith.addf %242, %243 : vector<8x32xf32>
    %245 = math.tanh %244 : vector<8x32xf32>
    %246 = arith.mulf %241, %245 : vector<8x32xf32>
    %247 = vector.extract_strided_slice %187 {offsets = [24, 0], sizes = [8, 128], strides = [1, 1]} : vector<64x128xf32> to vector<8x128xf32>
    %cst_37 = arith.constant dense<0.000000e+00> : vector<8x128xf32>
    %248 = tpu.matmul %246, %4, %cst_37 {dimension_numbers = #tpu.dot_dimension_numbers<[1], [0], [0], [1], [0, 0, 1, 1], [], []>} : vector<8x32xf32>, vector<32x128xf32>, vector<8x128xf32> -> vector<8x128xf32>
    %249 = arith.addf %247, %248 : vector<8x128xf32>
    %250 = vector.extract_strided_slice %249 {offsets = [0, 0], sizes = [8, 96], strides = [1, 1]} : vector<8x128xf32> to vector<8x96xf32>
    %251 = arith.negf %250 : vector<8x96xf32>
    %252 = math.exp %251 : vector<8x96xf32>
    %cst_38 = arith.constant 1.000000e+00 : f32
    %253 = vector.broadcast %cst_38 : f32 to vector<8x96xf32>
    %254 = arith.addf %253, %252 : vector<8x96xf32>
    %255 = arith.divf %253, %254 : vector<8x96xf32>
    %256 = vector.extract_strided_slice %249 {offsets = [0, 96], sizes = [8, 32], strides = [1, 1]} : vector<8x128xf32> to vector<8x32xf32>
    %257 = math.tanh %256 : vector<8x32xf32>
    %258 = vector.extract_strided_slice %255 {offsets = [0, 0], sizes = [8, 32], strides = [1, 1]} : vector<8x96xf32> to vector<8x32xf32>
    %259 = vector.extract_strided_slice %255 {offsets = [0, 32], sizes = [8, 32], strides = [1, 1]} : vector<8x96xf32> to vector<8x32xf32>
    %260 = vector.extract_strided_slice %255 {offsets = [0, 64], sizes = [8, 32], strides = [1, 1]} : vector<8x96xf32> to vector<8x32xf32>
    %261 = arith.mulf %259, %244 : vector<8x32xf32>
    %262 = arith.mulf %258, %257 : vector<8x32xf32>
    %263 = arith.addf %261, %262 : vector<8x32xf32>
    %264 = math.tanh %263 : vector<8x32xf32>
    %265 = arith.mulf %260, %264 : vector<8x32xf32>
    %266 = vector.extract_strided_slice %187 {offsets = [32, 0], sizes = [8, 128], strides = [1, 1]} : vector<64x128xf32> to vector<8x128xf32>
    %cst_39 = arith.constant dense<0.000000e+00> : vector<8x128xf32>
    %267 = tpu.matmul %265, %4, %cst_39 {dimension_numbers = #tpu.dot_dimension_numbers<[1], [0], [0], [1], [0, 0, 1, 1], [], []>} : vector<8x32xf32>, vector<32x128xf32>, vector<8x128xf32> -> vector<8x128xf32>
    %268 = arith.addf %266, %267 : vector<8x128xf32>
    %269 = vector.extract_strided_slice %268 {offsets = [0, 0], sizes = [8, 96], strides = [1, 1]} : vector<8x128xf32> to vector<8x96xf32>
    %270 = arith.negf %269 : vector<8x96xf32>
    %271 = math.exp %270 : vector<8x96xf32>
    %cst_40 = arith.constant 1.000000e+00 : f32
    %272 = vector.broadcast %cst_40 : f32 to vector<8x96xf32>
    %273 = arith.addf %272, %271 : vector<8x96xf32>
    %274 = arith.divf %272, %273 : vector<8x96xf32>
    %275 = vector.extract_strided_slice %268 {offsets = [0, 96], sizes = [8, 32], strides = [1, 1]} : vector<8x128xf32> to vector<8x32xf32>
    %276 = math.tanh %275 : vector<8x32xf32>
    %277 = vector.extract_strided_slice %274 {offsets = [0, 0], sizes = [8, 32], strides = [1, 1]} : vector<8x96xf32> to vector<8x32xf32>
    %278 = vector.extract_strided_slice %274 {offsets = [0, 32], sizes = [8, 32], strides = [1, 1]} : vector<8x96xf32> to vector<8x32xf32>
    %279 = vector.extract_strided_slice %274 {offsets = [0, 64], sizes = [8, 32], strides = [1, 1]} : vector<8x96xf32> to vector<8x32xf32>
    %280 = arith.mulf %278, %263 : vector<8x32xf32>
    %281 = arith.mulf %277, %276 : vector<8x32xf32>
    %282 = arith.addf %280, %281 : vector<8x32xf32>
    %283 = math.tanh %282 : vector<8x32xf32>
    %284 = arith.mulf %279, %283 : vector<8x32xf32>
    %285 = vector.extract_strided_slice %187 {offsets = [40, 0], sizes = [8, 128], strides = [1, 1]} : vector<64x128xf32> to vector<8x128xf32>
    %cst_41 = arith.constant dense<0.000000e+00> : vector<8x128xf32>
    %286 = tpu.matmul %284, %4, %cst_41 {dimension_numbers = #tpu.dot_dimension_numbers<[1], [0], [0], [1], [0, 0, 1, 1], [], []>} : vector<8x32xf32>, vector<32x128xf32>, vector<8x128xf32> -> vector<8x128xf32>
    %287 = arith.addf %285, %286 : vector<8x128xf32>
    %288 = vector.extract_strided_slice %287 {offsets = [0, 0], sizes = [8, 96], strides = [1, 1]} : vector<8x128xf32> to vector<8x96xf32>
    %289 = arith.negf %288 : vector<8x96xf32>
    %290 = math.exp %289 : vector<8x96xf32>
    %cst_42 = arith.constant 1.000000e+00 : f32
    %291 = vector.broadcast %cst_42 : f32 to vector<8x96xf32>
    %292 = arith.addf %291, %290 : vector<8x96xf32>
    %293 = arith.divf %291, %292 : vector<8x96xf32>
    %294 = vector.extract_strided_slice %287 {offsets = [0, 96], sizes = [8, 32], strides = [1, 1]} : vector<8x128xf32> to vector<8x32xf32>
    %295 = math.tanh %294 : vector<8x32xf32>
    %296 = vector.extract_strided_slice %293 {offsets = [0, 0], sizes = [8, 32], strides = [1, 1]} : vector<8x96xf32> to vector<8x32xf32>
    %297 = vector.extract_strided_slice %293 {offsets = [0, 32], sizes = [8, 32], strides = [1, 1]} : vector<8x96xf32> to vector<8x32xf32>
    %298 = vector.extract_strided_slice %293 {offsets = [0, 64], sizes = [8, 32], strides = [1, 1]} : vector<8x96xf32> to vector<8x32xf32>
    %299 = arith.mulf %297, %282 : vector<8x32xf32>
    %300 = arith.mulf %296, %295 : vector<8x32xf32>
    %301 = arith.addf %299, %300 : vector<8x32xf32>
    %302 = math.tanh %301 : vector<8x32xf32>
    %303 = arith.mulf %298, %302 : vector<8x32xf32>
    %304 = vector.extract_strided_slice %187 {offsets = [48, 0], sizes = [8, 128], strides = [1, 1]} : vector<64x128xf32> to vector<8x128xf32>
    %cst_43 = arith.constant dense<0.000000e+00> : vector<8x128xf32>
    %305 = tpu.matmul %303, %4, %cst_43 {dimension_numbers = #tpu.dot_dimension_numbers<[1], [0], [0], [1], [0, 0, 1, 1], [], []>} : vector<8x32xf32>, vector<32x128xf32>, vector<8x128xf32> -> vector<8x128xf32>
    %306 = arith.addf %304, %305 : vector<8x128xf32>
    %307 = vector.extract_strided_slice %306 {offsets = [0, 0], sizes = [8, 96], strides = [1, 1]} : vector<8x128xf32> to vector<8x96xf32>
    %308 = arith.negf %307 : vector<8x96xf32>
    %309 = math.exp %308 : vector<8x96xf32>
    %cst_44 = arith.constant 1.000000e+00 : f32
    %310 = vector.broadcast %cst_44 : f32 to vector<8x96xf32>
    %311 = arith.addf %310, %309 : vector<8x96xf32>
    %312 = arith.divf %310, %311 : vector<8x96xf32>
    %313 = vector.extract_strided_slice %306 {offsets = [0, 96], sizes = [8, 32], strides = [1, 1]} : vector<8x128xf32> to vector<8x32xf32>
    %314 = math.tanh %313 : vector<8x32xf32>
    %315 = vector.extract_strided_slice %312 {offsets = [0, 0], sizes = [8, 32], strides = [1, 1]} : vector<8x96xf32> to vector<8x32xf32>
    %316 = vector.extract_strided_slice %312 {offsets = [0, 32], sizes = [8, 32], strides = [1, 1]} : vector<8x96xf32> to vector<8x32xf32>
    %317 = vector.extract_strided_slice %312 {offsets = [0, 64], sizes = [8, 32], strides = [1, 1]} : vector<8x96xf32> to vector<8x32xf32>
    %318 = arith.mulf %316, %301 : vector<8x32xf32>
    %319 = arith.mulf %315, %314 : vector<8x32xf32>
    %320 = arith.addf %318, %319 : vector<8x32xf32>
    %321 = math.tanh %320 : vector<8x32xf32>
    %322 = arith.mulf %317, %321 : vector<8x32xf32>
    %323 = vector.extract_strided_slice %187 {offsets = [56, 0], sizes = [8, 128], strides = [1, 1]} : vector<64x128xf32> to vector<8x128xf32>
    %cst_45 = arith.constant dense<0.000000e+00> : vector<8x128xf32>
    %324 = tpu.matmul %322, %4, %cst_45 {dimension_numbers = #tpu.dot_dimension_numbers<[1], [0], [0], [1], [0, 0, 1, 1], [], []>} : vector<8x32xf32>, vector<32x128xf32>, vector<8x128xf32> -> vector<8x128xf32>
    %325 = arith.addf %323, %324 : vector<8x128xf32>
    %326 = vector.extract_strided_slice %325 {offsets = [0, 0], sizes = [8, 96], strides = [1, 1]} : vector<8x128xf32> to vector<8x96xf32>
    %327 = arith.negf %326 : vector<8x96xf32>
    %328 = math.exp %327 : vector<8x96xf32>
    %cst_46 = arith.constant 1.000000e+00 : f32
    %329 = vector.broadcast %cst_46 : f32 to vector<8x96xf32>
    %330 = arith.addf %329, %328 : vector<8x96xf32>
    %331 = arith.divf %329, %330 : vector<8x96xf32>
    %332 = vector.extract_strided_slice %325 {offsets = [0, 96], sizes = [8, 32], strides = [1, 1]} : vector<8x128xf32> to vector<8x32xf32>
    %333 = math.tanh %332 : vector<8x32xf32>
    %334 = vector.extract_strided_slice %331 {offsets = [0, 0], sizes = [8, 32], strides = [1, 1]} : vector<8x96xf32> to vector<8x32xf32>
    %335 = vector.extract_strided_slice %331 {offsets = [0, 32], sizes = [8, 32], strides = [1, 1]} : vector<8x96xf32> to vector<8x32xf32>
    %336 = vector.extract_strided_slice %331 {offsets = [0, 64], sizes = [8, 32], strides = [1, 1]} : vector<8x96xf32> to vector<8x32xf32>
    %337 = arith.mulf %335, %320 : vector<8x32xf32>
    %338 = arith.mulf %334, %333 : vector<8x32xf32>
    %339 = arith.addf %337, %338 : vector<8x32xf32>
    %340 = math.tanh %339 : vector<8x32xf32>
    %341 = arith.mulf %336, %340 : vector<8x32xf32>
    %cst_47 = arith.constant dense<0.000000e+00> : vector<8x128xf32>
    %342 = tpu.matmul %341, %6, %cst_47 {dimension_numbers = #tpu.dot_dimension_numbers<[1], [0], [0], [1], [0, 0, 1, 1], [], []>} : vector<8x32xf32>, vector<32x128xf32>, vector<8x128xf32> -> vector<8x128xf32>
    %343 = vector.broadcast %7 : vector<1x128xf32> to vector<8x128xf32>
    %344 = arith.addf %342, %343 : vector<8x128xf32>
    %cst_48 = arith.constant dense<0xFF800000> : vector<8xf32>
    %345 = vector.multi_reduction <maximumf>, %344, %cst_48 [1] : vector<8x128xf32> to vector<8xf32>
    %346 = vector.shape_cast %345 : vector<8xf32> to vector<8x1xf32>
    %347 = vector.broadcast %346 : vector<8x1xf32> to vector<8x128xf32>
    %348 = arith.subf %344, %347 : vector<8x128xf32>
    %349 = math.exp %348 : vector<8x128xf32>
    %cst_49 = arith.constant dense<0.000000e+00> : vector<8xf32>
    %350 = vector.multi_reduction <add>, %349, %cst_49 [1] : vector<8x128xf32> to vector<8xf32>
    %351 = vector.shape_cast %350 : vector<8xf32> to vector<8x1xf32>
    %352 = math.log %351 : vector<8x1xf32>
    %353 = vector.broadcast %352 : vector<8x1xf32> to vector<8x128xf32>
    %354 = arith.subf %348, %353 : vector<8x128xf32>
    %c0_50 = arith.constant 0 : index
    %c0_51 = arith.constant 0 : index
    %355 = vector.load %arg2[%c0_50, %c0_51] : memref<8x128xf32, #tpu.memory_space<vmem>>, vector<8x128xf32>
    tpu.vector_store %arg2[%c0_50, %c0_51], %354 {strides = array<i32>} : memref<8x128xf32, #tpu.memory_space<vmem>>, vector<8x128xf32>,
    return
  }
}

</mosaic_0001>

<llo_original>
// kernel: my_model_forward.1
$region0: #{my_model_forward.1}
  #allocation0 [shape = 'u32[]', space=smem, size = 0x4, offset = 0x4, fixed_abs, tag = 'smem constant byte address 0x4 - core index']
  #allocation1 [shape = 'u32[144,128]{1,0:T(1,128)}', space=vmem, size = 0x12000, scoped, tag = 'internal scratch']
  %s0 = inlined_call_operand.vmem [shape: f32[64,64], index: 0, kind: input, shape index: {}]
  %s1 = inlined_call_operand.vmem [shape: f32[280,256], index: 1, kind: input, shape index: {}]
  %s2 = inlined_call_operand.vmem [shape: f32[8,128], index: 2, kind: output, shape index: {}]
  %s3 = sld [smem:[#allocation0]]
  $region18: #{my_model_forward.1} parent=0
    _
  %s5 = ssub.s32 1, %s3
  %s6 = scalar_select 0, %s5, %s3
  // Predicated region
  $region2: #{my_model_forward.1} parent=0 // pred_check
    _
  $region3: #{my_model_forward.1} parent=0 // pred_check_branch
    %8 = sbr.rel (0) target = $region5
  $region4: #{my_model_forward.1} parent=0 // pred_region
    _
  $region5: #{my_model_forward.1} parent=0 // pred_fallthru
    _
  // Predicated region
  $region6: #{my_model_forward.1} parent=0 // pred_check
    _
  $region7: #{my_model_forward.1} parent=0 // pred_check_branch
    %10 = sbr.rel (0) target = $region9
  $region8: #{my_model_forward.1} parent=0 // pred_region
    _
  $region9: #{my_model_forward.1} parent=0 // pred_fallthru
    _
  %v11 = vld [vmem:[%s1] sm:$0xff]
  %v12 = vld [vmem:[%s1 + $0x8] sm:$0xff]
  %v13 = vld [vmem:[%s1 + $0x10] sm:$0xff]
  %v14 = vld [vmem:[%s1 + $0x18] sm:$0xff]
  %v15 = vld [vmem:[%s1 + $0x20] sm:$0xff]
  %v16 = vld [vmem:[%s1 + $0x28] sm:$0xff]
  %v17 = vld [vmem:[%s1 + $0x30] sm:$0xff]
  %v18 = vld [vmem:[%s1 + $0x38] sm:$0xff]
  %v19 = vld [vmem:[%s1 + $0x40] sm:$0xff]
  %v20 = vld [vmem:[%s1 + $0x48] sm:$0xff]
  %v21 = vld [vmem:[%s1 + $0x50] sm:$0xff]
  %v22 = vld [vmem:[%s1 + $0x58] sm:$0xff]
  %v23 = vld [vmem:[%s1 + $0x60] sm:$0xff]
  %v24 = vld [vmem:[%s1 + $0x68] sm:$0xff]
  %v25 = vld [vmem:[%s1 + $0x70] sm:$0xff]
  %v26 = vld [vmem:[%s1 + $0x78] sm:$0xff]
  %v27 = vld [vmem:[%s1 + $0x80] sm:$0xff]
  %v28 = vld [vmem:[%s1 + $0x88] sm:$0xff]
  %v29 = vld [vmem:[%s1 + $0x90] sm:$0xff]
  %v30 = vld [vmem:[%s1 + $0x98] sm:$0xff]
  %v31 = vld [vmem:[%s1 + $0xa0] sm:$0xff]
  %v32 = vld [vmem:[%s1 + $0xa8] sm:$0xff]
  %v33 = vld [vmem:[%s1 + $0xb0] sm:$0xff]
  %v34 = vld [vmem:[%s1 + $0xb8] sm:$0xff]
  %v35 = vld [vmem:[%s1 + $0xc0] sm:$0xff]
  %v36 = vld [vmem:[%s1 + $0xc8] sm:$0xff]
  %v37 = vld [vmem:[%s1 + $0xd0] sm:$0xff]
  %v38 = vld [vmem:[%s1 + $0xd8] sm:$0xff]
  %v39 = vld [vmem:[%s1 + $0xe0] sm:$0xff]
  %v40 = vld [vmem:[%s1 + $0xe8] sm:$0xff]
  %v41 = vld [vmem:[%s1 + $0xf0] sm:$0xff]
  %v42 = vld [vmem:[%s1 + $0xf8] sm:$0xff]
  %s43 = scalar_lea.vmem %s1, 256
  %v44 = vld [vmem:[%s43] ss:$8 sm:$0x3]
  %v45 = vld [vmem:[%s1 + $0x110] sm:$0xff]
  %v46 = vld [vmem:[%s1 + $0x120] sm:$0xff]
  %v47 = vld [vmem:[%s1 + $0x130] sm:$0xff]
  %v48 = vld [vmem:[%s1 + $0x140] sm:$0xff]
  %v49 = vld [vmem:[%s1 + $0x150] sm:$0xff]
  %v50 = vld [vmem:[%s1 + $0x160] sm:$0xff]
  %v51 = vld [vmem:[%s1 + $0x170] sm:$0xff]
  %v52 = vld [vmem:[%s1 + $0x180] sm:$0xff]
  %v53 = vld [vmem:[%s1 + $0x190] sm:$0xff]
  %v54 = vld [vmem:[%s1 + $0x1a0] sm:$0xff]
  %v55 = vld [vmem:[%s1 + $0x1b0] sm:$0xff]
  %v56 = vld [vmem:[%s1 + $0x1c0] sm:$0xff]
  %v57 = vld [vmem:[%s1 + $0x1d0] ss:$0 sm:$0xff]
  %v58 = vld [vmem:[%s1 + $0x1e0] sm:$0xff]
  %v59 = vld [vmem:[%s1 + $0x1f0] sm:$0xff]
  %v60 = vld [vmem:[%s1 + $0x200] sm:$0xff]
  %v61 = vld [vmem:[%s1 + $0x210] sm:$0xff]
  %v62 = vld [vmem:[%s1 + $0x220] ss:$0 sm:$0xff]
  %v63 = vld [vmem:[%s0] sm:$0xff]
  %v64 = vld [vmem:[%s0 + $0x8] sm:$0xff]
  %v65 = vld [vmem:[%s0 + $0x10] sm:$0xff]
  %v66 = vld [vmem:[%s0 + $0x18] sm:$0xff]
  %v67 = vld [vmem:[%s0 + $0x20] sm:$0xff]
  %v68 = vld [vmem:[%s0 + $0x28] sm:$0xff]
  %v69 = vld [vmem:[%s0 + $0x30] sm:$0xff]
  %v70 = vld [vmem:[%s0 + $0x38] sm:$0xff]
  %v72 = vlaneseq
  %v73 = vshrl.u32 %v72, 7
  %v74 = vsub.s32 0, %v73
  %v75 = vrot.slane %v44, %v74
  %v76 = vlaneseq
  %v77 = vshrl.u32 %v76, 7
  %v78 = vsub.s32 1, %v77
  %v79 = vrot.slane %v44, %v78
  %vm82 = vcmask 523264
  %v84 = vsel %vm82, %v63, 0
  %v87 = vsel %vm82, %v64, 0
  %v90 = vsel %vm82, %v65, 0
  %v93 = vsel %vm82, %v66, 0
  %v96 = vsel %vm82, %v67, 0
  %v99 = vsel %vm82, %v68, 0
  %v102 = vsel %vm82, %v69, 0
  %v105 = vsel %vm82, %v70, 0
  %107 = vmatprep.subr.mxu0 %v12
  %108 = vmatpush1.msra.mxu0 %v11
  %109 = vmatprep.subr.mxu0 %v14
  %110 = vmatpush1.msra.mxu0 %v13
  %111 = vmatprep.subr.mxu0 %v16
  %112 = vmatpush1.msra.mxu0 %v15
  %113 = vmatprep.subr.mxu0 %v18
  %114 = vmatpush1.msra.mxu0 %v17
  %115 = vmatprep.subr.mxu0 %v20
  %116 = vmatpush1.msra.mxu0 %v19
  %117 = vmatprep.subr.mxu0 %v22
  %118 = vmatpush1.msra.mxu0 %v21
  %119 = vmatprep.subr.mxu0 %v24
  %120 = vmatpush1.msra.mxu0 %v23
  %121 = vmatprep.subr.mxu0 %v26
  %122 = vmatpush1.msra.mxu0 %v25
  %123 = vmatprep.subr.mxu0 0.0
  %124 = vmatpush1.msra.mxu0 0.0
  %125 = vmatprep.subr.mxu0 0.0
  %126 = vmatpush1.msra.mxu0 0.0
  %127 = vmatprep.subr.mxu0 0.0
  %128 = vmatpush1.msra.mxu0 0.0
  %129 = vmatprep.subr.mxu0 0.0
  %130 = vmatpush1.msra.mxu0 0.0
  %131 = vmatprep.subr.mxu0 0.0
  %132 = vmatpush1.msra.mxu0 0.0
  %133 = vmatprep.subr.mxu0 0.0
  %134 = vmatpush1.msra.mxu0 0.0
  %135 = vmatprep.subr.mxu0 0.0
  %136 = vmatpush1.msra.mxu0 0.0
  %137 = vmatprep.subr.mxu0 0.0
  %138 = vmatpush1.msra.mxu0 0.0
  %139 = vmatprep.subr.mxu0 0.0
  %140 = vmatpush1.msra.mxu0 0.0
  %141 = vmatprep.subr.mxu0 0.0
  %142 = vmatpush1.msra.mxu0 0.0
  %143 = vmatprep.subr.mxu0 0.0
  %144 = vmatpush1.msra.mxu0 0.0
  %145 = vmatprep.subr.mxu0 0.0
  %146 = vmatpush1.msra.mxu0 0.0
  %147 = vmatprep.subr.mxu0 0.0
  %148 = vmatpush1.msra.mxu0 0.0
  %149 = vmatprep.subr.mxu0 0.0
  %150 = vmatpush1.msra.mxu0 0.0
  %151 = vmatprep.subr.mxu0 0.0
  %152 = vmatpush1.msra.mxu0 0.0
  %153 = vmatprep.subr.mxu0 0.0
  %154 = vmatpush1.msra.mxu0 0.0
  %155 = vmatprep.subr.mxu0 0.0
  %156 = vmatpush1.msra.mxu0 0.0
  %157 = vmatprep.subr.mxu0 0.0
  %158 = vmatpush1.msra.mxu0 0.0
  %159 = vmatprep.subr.mxu0 0.0
  %160 = vmatpush1.msra.mxu0 0.0
  %161 = vmatprep.subr.mxu0 0.0
  %162 = vmatpush1.msra.mxu0 0.0
  %163 = vmatprep.subr.mxu0 0.0
  %164 = vmatpush1.msra.mxu0 0.0
  %165 = vmatprep.subr.mxu0 0.0
  %166 = vmatpush1.msra.mxu0 0.0
  %167 = vmatprep.subr.mxu0 0.0
  %168 = vmatpush1.msra.mxu0 0.0
  %169 = vmatprep.subr.mxu0 0.0
  %170 = vmatpush1.msra.mxu0 0.0
  %171 = vmatprep.mubr.f32.mxu0 0.0
  %172 = vmatmul.mubr.f32.gmra.mrb[0].mxu0 %v84
  %v173 = vpop.f32.mrb[0].mxu0
  %v174 = vadd.f32 %v75, %v173
  %v175 = vpop.f32.mrb[0].mxu0
  %v176 = vadd.f32 %v79, %v175
  %177 = vmatprep.mubr.f32.mxu0 0.0
  %178 = vmatmul.mubr.f32.gmra.mrb[0].mxu0 %v87
  %v179 = vpop.f32.mrb[0].mxu0
  %v180 = vadd.f32 %v75, %v179
  %v181 = vpop.f32.mrb[0].mxu0
  %v182 = vadd.f32 %v79, %v181
  %183 = vmatprep.mubr.f32.mxu0 0.0
  %184 = vmatmul.mubr.f32.gmra.mrb[0].mxu0 %v90
  %v185 = vpop.f32.mrb[0].mxu0
  %v186 = vadd.f32 %v75, %v185
  %v187 = vpop.f32.mrb[0].mxu0
  %v188 = vadd.f32 %v79, %v187
  %189 = vmatprep.mubr.f32.mxu0 0.0
  %190 = vmatmul.mubr.f32.gmra.mrb[0].mxu0 %v93
  %v191 = vpop.f32.mrb[0].mxu0
  %v192 = vadd.f32 %v75, %v191
  %v193 = vpop.f32.mrb[0].mxu0
  %v194 = vadd.f32 %v79, %v193
  %195 = vmatprep.mubr.f32.mxu0 0.0
  %196 = vmatmul.mubr.f32.gmra.mrb[0].mxu0 %v96
  %v197 = vpop.f32.mrb[0].mxu0
  %v198 = vadd.f32 %v75, %v197
  %v199 = vpop.f32.mrb[0].mxu0
  %v200 = vadd.f32 %v79, %v199
  %201 = vmatprep.mubr.f32.mxu0 0.0
  %202 = vmatmul.mubr.f32.gmra.mrb[0].mxu0 %v99
  %v203 = vpop.f32.mrb[0].mxu0
  %v204 = vadd.f32 %v75, %v203
  %v205 = vpop.f32.mrb[0].mxu0
  %v206 = vadd.f32 %v79, %v205
  %207 = vmatprep.mubr.f32.mxu0 0.0
  %208 = vmatmul.mubr.f32.gmra.mrb[0].mxu0 %v102
  %v209 = vpop.f32.mrb[0].mxu0
  %v210 = vadd.f32 %v75, %v209
  %v211 = vpop.f32.mrb[0].mxu0
  %v212 = vadd.f32 %v79, %v211
  %213 = vmatprep.mubr.f32.mxu0 0.0
  %214 = vmatmul.mubr.f32.gmra.mrb[0].mxu0 %v105
  %v215 = vpop.f32.mrb[0].mxu0
  %v216 = vadd.f32 %v75, %v215
  %v217 = vpop.f32.mrb[0].mxu0
  %v218 = vadd.f32 %v79, %v217
  %219 = vdwg.mxu0
  %v221 = vsel %vm82, 0.0, 0
  %223 = vmatprep.subr.mxu0 %v28
  %224 = vmatpush1.msra.mxu0 %v27
  %225 = vmatprep.subr.mxu0 %v30
  %226 = vmatpush1.msra.mxu0 %v29
  %227 = vmatprep.subr.mxu0 %v32
  %228 = vmatpush1.msra.mxu0 %v31
  %229 = vmatprep.subr.mxu0 %v34
  %230 = vmatpush1.msra.mxu0 %v33
  %231 = vmatprep.subr.mxu0 %v36
  %232 = vmatpush1.msra.mxu0 %v35
  %233 = vmatprep.subr.mxu0 %v38
  %234 = vmatpush1.msra.mxu0 %v37
  %235 = vmatprep.subr.mxu0 %v40
  %236 = vmatpush1.msra.mxu0 %v39
  %237 = vmatprep.subr.mxu0 %v42
  %238 = vmatpush1.msra.mxu0 %v41
  %239 = vmatprep.subr.mxu0 0.0
  %240 = vmatpush1.msra.mxu0 0.0
  %241 = vmatprep.subr.mxu0 0.0
  %242 = vmatpush1.msra.mxu0 0.0
  %243 = vmatprep.subr.mxu0 0.0
  %244 = vmatpush1.msra.mxu0 0.0
  %245 = vmatprep.subr.mxu0 0.0
  %246 = vmatpush1.msra.mxu0 0.0
  %247 = vmatprep.subr.mxu0 0.0
  %248 = vmatpush1.msra.mxu0 0.0
  %249 = vmatprep.subr.mxu0 0.0
  %250 = vmatpush1.msra.mxu0 0.0
  %251 = vmatprep.subr.mxu0 0.0
  %252 = vmatpush1.msra.mxu0 0.0
  %253 = vmatprep.subr.mxu0 0.0
  %254 = vmatpush1.msra.mxu0 0.0
  %255 = vmatprep.subr.mxu0 0.0
  %256 = vmatpush1.msra.mxu0 0.0
  %257 = vmatprep.subr.mxu0 0.0
  %258 = vmatpush1.msra.mxu0 0.0
  %259 = vmatprep.subr.mxu0 0.0
  %260 = vmatpush1.msra.mxu0 0.0
  %261 = vmatprep.subr.mxu0 0.0
  %262 = vmatpush1.msra.mxu0 0.0
  %263 = vmatprep.subr.mxu0 0.0
  %264 = vmatpush1.msra.mxu0 0.0
  %265 = vmatprep.subr.mxu0 0.0
  %266 = vmatpush1.msra.mxu0 0.0
  %267 = vmatprep.subr.mxu0 0.0
  %268 = vmatpush1.msra.mxu0 0.0
  %269 = vmatprep.subr.mxu0 0.0
  %270 = vmatpush1.msra.mxu0 0.0
  %271 = vmatprep.subr.mxu0 0.0
  %272 = vmatpush1.msra.mxu0 0.0
  %273 = vmatprep.subr.mxu0 0.0
  %274 = vmatpush1.msra.mxu0 0.0
  %275 = vmatprep.subr.mxu0 0.0
  %276 = vmatpush1.msra.mxu0 0.0
  %277 = vmatprep.subr.mxu0 0.0
  %278 = vmatpush1.msra.mxu0 0.0
  %279 = vmatprep.subr.mxu0 0.0
  %280 = vmatpush1.msra.mxu0 0.0
  %281 = vmatprep.subr.mxu0 0.0
  %282 = vmatpush1.msra.mxu0 0.0
  %283 = vmatprep.subr.mxu0 0.0
  %284 = vmatpush1.msra.mxu0 0.0
  %285 = vmatprep.subr.mxu0 0.0
  %286 = vmatpush1.msra.mxu0 0.0
  %287 = vmatprep.mubr.f32.mxu0 0.0
  %288 = vmatmul.mubr.f32.gmra.mrb[0].mxu0 %v221
  %v289 = vpop.f32.mrb[0].mxu0
  %v290 = vadd.f32 0.0, %v289
  %v291 = vpop.f32.mrb[0].mxu0
  %v292 = vadd.f32 0.0, %v291
  %293 = vdwg.mxu0
  %v294 = vadd.f32 %v174, %v290
  %v295 = vadd.f32 %v176, %v292
  %v296 = vxor.u32 %v294, 2147483648
  %v297 = vxor.u32 %v295, 2147483648
  %v298 = vmul.f32 %v296, 1.442695
  %v299 = vpow.pop %v298
  %v300 = vmul.f32 %v297, 1.442695
  %v301 = vpow.pop %v300
  %v302 = vadd.f32 %v299, 1.0
  %v303 = vadd.f32 %v301, 1.0
  %v304 = vrcp.pop %v302
  %v305 = vmul.f32 1.0, %v304
  %v306 = vrcp.pop %v303
  %v307 = vmul.f32 1.0, %v306
  %v308 = vtanh.pop %v295
  %v309 = vmul.f32 %v305, 0.0
  %311 = vrot.lane.b32.xlu0 %v308, 64
  %v312 = vpop.permute.xlu0 %311
  %v314 = vmul.f32 %v305, %v312
  %316 = vrot.lane.b32.xlu0 %v314, 64
  %v317 = vpop.permute.xlu0 %316
  %v319 = vadd.f32 %v309, %v317
  %v320 = vtanh.pop %v319
  %322 = vrot.lane.b32.xlu0 %v320, 64
  %v323 = vpop.permute.xlu0 %322
  %v325 = vmul.f32 %v307, %v323
  %v327 = vsel %vm82, %v325, 0
  %329 = vmatprep.subr.mxu0 %v28
  %330 = vmatpush1.msra.mxu0 %v27
  %331 = vmatprep.subr.mxu0 %v30
  %332 = vmatpush1.msra.mxu0 %v29
  %333 = vmatprep.subr.mxu0 %v32
  %334 = vmatpush1.msra.mxu0 %v31
  %335 = vmatprep.subr.mxu0 %v34
  %336 = vmatpush1.msra.mxu0 %v33
  %337 = vmatprep.subr.mxu0 %v36
  %338 = vmatpush1.msra.mxu0 %v35
  %339 = vmatprep.subr.mxu0 %v38
  %340 = vmatpush1.msra.mxu0 %v37
  %341 = vmatprep.subr.mxu0 %v40
  %342 = vmatpush1.msra.mxu0 %v39
  %343 = vmatprep.subr.mxu0 %v42
  %344 = vmatpush1.msra.mxu0 %v41
  %345 = vmatprep.subr.mxu0 0.0
  %346 = vmatpush1.msra.mxu0 0.0
  %347 = vmatprep.subr.mxu0 0.0
  %348 = vmatpush1.msra.mxu0 0.0
  %349 = vmatprep.subr.mxu0 0.0
  %350 = vmatpush1.msra.mxu0 0.0
  %351 = vmatprep.subr.mxu0 0.0
  %352 = vmatpush1.msra.mxu0 0.0
  %353 = vmatprep.subr.mxu0 0.0
  %354 = vmatpush1.msra.mxu0 0.0
  %355 = vmatprep.subr.mxu0 0.0
  %356 = vmatpush1.msra.mxu0 0.0
  %357 = vmatprep.subr.mxu0 0.0
  %358 = vmatpush1.msra.mxu0 0.0
  %359 = vmatprep.subr.mxu0 0.0
  %360 = vmatpush1.msra.mxu0 0.0
  %361 = vmatprep.subr.mxu0 0.0
  %362 = vmatpush1.msra.mxu0 0.0
  %363 = vmatprep.subr.mxu0 0.0
  %364 = vmatpush1.msra.mxu0 0.0
  %365 = vmatprep.subr.mxu0 0.0
  %366 = vmatpush1.msra.mxu0 0.0
  %367 = vmatprep.subr.mxu0 0.0
  %368 = vmatpush1.msra.mxu0 0.0
  %369 = vmatprep.subr.mxu0 0.0
  %370 = vmatpush1.msra.mxu0 0.0
  %371 = vmatprep.subr.mxu0 0.0
  %372 = vmatpush1.msra.mxu0 0.0
  %373 = vmatprep.subr.mxu0 0.0
  %374 = vmatpush1.msra.mxu0 0.0
  %375 = vmatprep.subr.mxu0 0.0
  %376 = vmatpush1.msra.mxu0 0.0
  %377 = vmatprep.subr.mxu0 0.0
  %378 = vmatpush1.msra.mxu0 0.0
  %379 = vmatprep.subr.mxu0 0.0
  %380 = vmatpush1.msra.mxu0 0.0
  %381 = vmatprep.subr.mxu0 0.0
  %382 = vmatpush1.msra.mxu0 0.0
  %383 = vmatprep.subr.mxu0 0.0
  %384 = vmatpush1.msra.mxu0 0.0
  %385 = vmatprep.subr.mxu0 0.0
  %386 = vmatpush1.msra.mxu0 0.0
  %387 = vmatprep.subr.mxu0 0.0
  %388 = vmatpush1.msra.mxu0 0.0
  %389 = vmatprep.subr.mxu0 0.0
  %390 = vmatpush1.msra.mxu0 0.0
  %391 = vmatprep.subr.mxu0 0.0
  %392 = vmatpush1.msra.mxu0 0.0
  %393 = vmatprep.mubr.f32.mxu0 0.0
  %394 = vmatmul.mubr.f32.gmra.mrb[0].mxu0 %v327
  %v395 = vpop.f32.mrb[0].mxu0
  %v396 = vadd.f32 0.0, %v395
  %v397 = vpop.f32.mrb[0].mxu0
  %v398 = vadd.f32 0.0, %v397
  %399 = vdwg.mxu0
  %v400 = vadd.f32 %v180, %v396
  %v401 = vadd.f32 %v182, %v398
  %v402 = vxor.u32 %v400, 2147483648
  %v403 = vxor.u32 %v401, 2147483648
  %v404 = vmul.f32 %v402, 1.442695
  %v405 = vpow.pop %v404
  %v406 = vmul.f32 %v403, 1.442695
  %v407 = vpow.pop %v406
  %v408 = vadd.f32 %v405, 1.0
  %v409 = vadd.f32 %v407, 1.0
  %v410 = vrcp.pop %v408
  %v411 = vmul.f32 1.0, %v410
  %v412 = vrcp.pop %v409
  %v413 = vmul.f32 1.0, %v412
  %v414 = vtanh.pop %v401
  %v415 = vmul.f32 %v411, %v319
  %417 = vrot.lane.b32.xlu0 %v414, 64
  %v418 = vpop.permute.xlu0 %417
  %v420 = vmul.f32 %v411, %v418
  %422 = vrot.lane.b32.xlu0 %v420, 64
  %v423 = vpop.permute.xlu0 %422
  %v425 = vadd.f32 %v415, %v423
  %v426 = vtanh.pop %v425
  %428 = vrot.lane.b32.xlu0 %v426, 64
  %v429 = vpop.permute.xlu0 %428
  %v431 = vmul.f32 %v413, %v429
  %v433 = vsel %vm82, %v431, 0
  %435 = vmatprep.subr.mxu0 %v28
  %436 = vmatpush1.msra.mxu0 %v27
  %437 = vmatprep.subr.mxu0 %v30
  %438 = vmatpush1.msra.mxu0 %v29
  %439 = vmatprep.subr.mxu0 %v32
  %440 = vmatpush1.msra.mxu0 %v31
  %441 = vmatprep.subr.mxu0 %v34
  %442 = vmatpush1.msra.mxu0 %v33
  %443 = vmatprep.subr.mxu0 %v36
  %444 = vmatpush1.msra.mxu0 %v35
  %445 = vmatprep.subr.mxu0 %v38
  %446 = vmatpush1.msra.mxu0 %v37
  %447 = vmatprep.subr.mxu0 %v40
  %448 = vmatpush1.msra.mxu0 %v39
  %449 = vmatprep.subr.mxu0 %v42
  %450 = vmatpush1.msra.mxu0 %v41
  %451 = vmatprep.subr.mxu0 0.0
  %452 = vmatpush1.msra.mxu0 0.0
  %453 = vmatprep.subr.mxu0 0.0
  %454 = vmatpush1.msra.mxu0 0.0
  %455 = vmatprep.subr.mxu0 0.0
  %456 = vmatpush1.msra.mxu0 0.0
  %457 = vmatprep.subr.mxu0 0.0
  %458 = vmatpush1.msra.mxu0 0.0
  %459 = vmatprep.subr.mxu0 0.0
  %460 = vmatpush1.msra.mxu0 0.0
  %461 = vmatprep.subr.mxu0 0.0
  %462 = vmatpush1.msra.mxu0 0.0
  %463 = vmatprep.subr.mxu0 0.0
  %464 = vmatpush1.msra.mxu0 0.0
  %465 = vmatprep.subr.mxu0 0.0
  %466 = vmatpush1.msra.mxu0 0.0
  %467 = vmatprep.subr.mxu0 0.0
  %468 = vmatpush1.msra.mxu0 0.0
  %469 = vmatprep.subr.mxu0 0.0
  %470 = vmatpush1.msra.mxu0 0.0
  %471 = vmatprep.subr.mxu0 0.0
  %472 = vmatpush1.msra.mxu0 0.0
  %473 = vmatprep.subr.mxu0 0.0
  %474 = vmatpush1.msra.mxu0 0.0
  %475 = vmatprep.subr.mxu0 0.0
  %476 = vmatpush1.msra.mxu0 0.0
  %477 = vmatprep.subr.mxu0 0.0
  %478 = vmatpush1.msra.mxu0 0.0
  %479 = vmatprep.subr.mxu0 0.0
  %480 = vmatpush1.msra.mxu0 0.0
  %481 = vmatprep.subr.mxu0 0.0
  %482 = vmatpush1.msra.mxu0 0.0
  %483 = vmatprep.subr.mxu0 0.0
  %484 = vmatpush1.msra.mxu0 0.0
  %485 = vmatprep.subr.mxu0 0.0
  %486 = vmatpush1.msra.mxu0 0.0
  %487 = vmatprep.subr.mxu0 0.0
  %488 = vmatpush1.msra.mxu0 0.0
  %489 = vmatprep.subr.mxu0 0.0
  %490 = vmatpush1.msra.mxu0 0.0
  %491 = vmatprep.subr.mxu0 0.0
  %492 = vmatpush1.msra.mxu0 0.0
  %493 = vmatprep.subr.mxu0 0.0
  %494 = vmatpush1.msra.mxu0 0.0
  %495 = vmatprep.subr.mxu0 0.0
  %496 = vmatpush1.msra.mxu0 0.0
  %497 = vmatprep.subr.mxu0 0.0
  %498 = vmatpush1.msra.mxu0 0.0
  %499 = vmatprep.mubr.f32.mxu0 0.0
  %500 = vmatmul.mubr.f32.gmra.mrb[0].mxu0 %v433
  %v501 = vpop.f32.mrb[0].mxu0
  %v502 = vadd.f32 0.0, %v501
  %v503 = vpop.f32.mrb[0].mxu0
  %v504 = vadd.f32 0.0, %v503
  %505 = vdwg.mxu0
  %v506 = vadd.f32 %v186, %v502
  %v507 = vadd.f32 %v188, %v504
  %v508 = vxor.u32 %v506, 2147483648
  %v509 = vxor.u32 %v507, 2147483648
  %v510 = vmul.f32 %v508, 1.442695
  %v511 = vpow.pop %v510
  %v512 = vmul.f32 %v509, 1.442695
  %v513 = vpow.pop %v512
  %v514 = vadd.f32 %v511, 1.0
  %v515 = vadd.f32 %v513, 1.0
  %v516 = vrcp.pop %v514
  %v517 = vmul.f32 1.0, %v516
  %v518 = vrcp.pop %v515
  %v519 = vmul.f32 1.0, %v518
  %v520 = vtanh.pop %v507
  %v521 = vmul.f32 %v517, %v425
  %523 = vrot.lane.b32.xlu0 %v520, 64
  %v524 = vpop.permute.xlu0 %523
  %v526 = vmul.f32 %v517, %v524
  %528 = vrot.lane.b32.xlu0 %v526, 64
  %v529 = vpop.permute.xlu0 %528
  %v531 = vadd.f32 %v521, %v529
  %v532 = vtanh.pop %v531
  %534 = vrot.lane.b32.xlu0 %v532, 64
  %v535 = vpop.permute.xlu0 %534
  %v537 = vmul.f32 %v519, %v535
  %v539 = vsel %vm82, %v537, 0
  %541 = vmatprep.subr.mxu0 %v28
  %542 = vmatpush1.msra.mxu0 %v27
  %543 = vmatprep.subr.mxu0 %v30
  %544 = vmatpush1.msra.mxu0 %v29
  %545 = vmatprep.subr.mxu0 %v32
  %546 = vmatpush1.msra.mxu0 %v31
  %547 = vmatprep.subr.mxu0 %v34
  %548 = vmatpush1.msra.mxu0 %v33
  %549 = vmatprep.subr.mxu0 %v36
  %550 = vmatpush1.msra.mxu0 %v35
  %551 = vmatprep.subr.mxu0 %v38
  %552 = vmatpush1.msra.mxu0 %v37
  %553 = vmatprep.subr.mxu0 %v40
  %554 = vmatpush1.msra.mxu0 %v39
  %555 = vmatprep.subr.mxu0 %v42
  %556 = vmatpush1.msra.mxu0 %v41
  %557 = vmatprep.subr.mxu0 0.0
  %558 = vmatpush1.msra.mxu0 0.0
  %559 = vmatprep.subr.mxu0 0.0
  %560 = vmatpush1.msra.mxu0 0.0
  %561 = vmatprep.subr.mxu0 0.0
  %562 = vmatpush1.msra.mxu0 0.0
  %563 = vmatprep.subr.mxu0 0.0
  %564 = vmatpush1.msra.mxu0 0.0
  %565 = vmatprep.subr.mxu0 0.0
  %566 = vmatpush1.msra.mxu0 0.0
  %567 = vmatprep.subr.mxu0 0.0
  %568 = vmatpush1.msra.mxu0 0.0
  %569 = vmatprep.subr.mxu0 0.0
  %570 = vmatpush1.msra.mxu0 0.0
  %571 = vmatprep.subr.mxu0 0.0
  %572 = vmatpush1.msra.mxu0 0.0
  %573 = vmatprep.subr.mxu0 0.0
  %574 = vmatpush1.msra.mxu0 0.0
  %575 = vmatprep.subr.mxu0 0.0
  %576 = vmatpush1.msra.mxu0 0.0
  %577 = vmatprep.subr.mxu0 0.0
  %578 = vmatpush1.msra.mxu0 0.0
  %579 = vmatprep.subr.mxu0 0.0
  %580 = vmatpush1.msra.mxu0 0.0
  %581 = vmatprep.subr.mxu0 0.0
  %582 = vmatpush1.msra.mxu0 0.0
  %583 = vmatprep.subr.mxu0 0.0
  %584 = vmatpush1.msra.mxu0 0.0
  %585 = vmatprep.subr.mxu0 0.0
  %586 = vmatpush1.msra.mxu0 0.0
  %587 = vmatprep.subr.mxu0 0.0
  %588 = vmatpush1.msra.mxu0 0.0
  %589 = vmatprep.subr.mxu0 0.0
  %590 = vmatpush1.msra.mxu0 0.0
  %591 = vmatprep.subr.mxu0 0.0
  %592 = vmatpush1.msra.mxu0 0.0
  %593 = vmatprep.subr.mxu0 0.0
  %594 = vmatpush1.msra.mxu0 0.0
  %595 = vmatprep.subr.mxu0 0.0
  %596 = vmatpush1.msra.mxu0 0.0
  %597 = vmatprep.subr.mxu0 0.0
  %598 = vmatpush1.msra.mxu0 0.0
  %599 = vmatprep.subr.mxu0 0.0
  %600 = vmatpush1.msra.mxu0 0.0
  %601 = vmatprep.subr.mxu0 0.0
  %602 = vmatpush1.msra.mxu0 0.0
  %603 = vmatprep.subr.mxu0 0.0
  %604 = vmatpush1.msra.mxu0 0.0
  %605 = vmatprep.mubr.f32.mxu0 0.0
  %606 = vmatmul.mubr.f32.gmra.mrb[0].mxu0 %v539
  %v607 = vpop.f32.mrb[0].mxu0
  %v608 = vadd.f32 0.0, %v607
  %v609 = vpop.f32.mrb[0].mxu0
  %v610 = vadd.f32 0.0, %v609
  %611 = vdwg.mxu0
  %v612 = vadd.f32 %v192, %v608
  %v613 = vadd.f32 %v194, %v610
  %v614 = vxor.u32 %v612, 2147483648
  %v615 = vxor.u32 %v613, 2147483648
  %v616 = vmul.f32 %v614, 1.442695
  %v617 = vpow.pop %v616
  %v618 = vmul.f32 %v615, 1.442695
  %v619 = vpow.pop %v618
  %v620 = vadd.f32 %v617, 1.0
  %v621 = vadd.f32 %v619, 1.0
  %v622 = vrcp.pop %v620
  %v623 = vmul.f32 1.0, %v622
  %v624 = vrcp.pop %v621
  %v625 = vmul.f32 1.0, %v624
  %v626 = vtanh.pop %v613
  %v627 = vmul.f32 %v623, %v531
  %629 = vrot.lane.b32.xlu0 %v626, 64
  %v630 = vpop.permute.xlu0 %629
  %v632 = vmul.f32 %v623, %v630
  %634 = vrot.lane.b32.xlu0 %v632, 64
  %v635 = vpop.permute.xlu0 %634
  %v637 = vadd.f32 %v627, %v635
  %v638 = vtanh.pop %v637
  %640 = vrot.lane.b32.xlu0 %v638, 64
  %v641 = vpop.permute.xlu0 %640
  %v643 = vmul.f32 %v625, %v641
  %v645 = vsel %vm82, %v643, 0
  %647 = vmatprep.subr.mxu0 %v28
  %648 = vmatpush1.msra.mxu0 %v27
  %649 = vmatprep.subr.mxu0 %v30
  %650 = vmatpush1.msra.mxu0 %v29
  %651 = vmatprep.subr.mxu0 %v32
  %652 = vmatpush1.msra.mxu0 %v31
  %653 = vmatprep.subr.mxu0 %v34
  %654 = vmatpush1.msra.mxu0 %v33
  %655 = vmatprep.subr.mxu0 %v36
  %656 = vmatpush1.msra.mxu0 %v35
  %657 = vmatprep.subr.mxu0 %v38
  %658 = vmatpush1.msra.mxu0 %v37
  %659 = vmatprep.subr.mxu0 %v40
  %660 = vmatpush1.msra.mxu0 %v39
  %661 = vmatprep.subr.mxu0 %v42
  %662 = vmatpush1.msra.mxu0 %v41
  %663 = vmatprep.subr.mxu0 0.0
  %664 = vmatpush1.msra.mxu0 0.0
  %665 = vmatprep.subr.mxu0 0.0
  %666 = vmatpush1.msra.mxu0 0.0
  %667 = vmatprep.subr.mxu0 0.0
  %668 = vmatpush1.msra.mxu0 0.0
  %669 = vmatprep.subr.mxu0 0.0
  %670 = vmatpush1.msra.mxu0 0.0
  %671 = vmatprep.subr.mxu0 0.0
  %672 = vmatpush1.msra.mxu0 0.0
  %673 = vmatprep.subr.mxu0 0.0
  %674 = vmatpush1.msra.mxu0 0.0
  %675 = vmatprep.subr.mxu0 0.0
  %676 = vmatpush1.msra.mxu0 0.0
  %677 = vmatprep.subr.mxu0 0.0
  %678 = vmatpush1.msra.mxu0 0.0
  %679 = vmatprep.subr.mxu0 0.0
  %680 = vmatpush1.msra.mxu0 0.0
  %681 = vmatprep.subr.mxu0 0.0
  %682 = vmatpush1.msra.mxu0 0.0
  %683 = vmatprep.subr.mxu0 0.0
  %684 = vmatpush1.msra.mxu0 0.0
  %685 = vmatprep.subr.mxu0 0.0
  %686 = vmatpush1.msra.mxu0 0.0
  %687 = vmatprep.subr.mxu0 0.0
  %688 = vmatpush1.msra.mxu0 0.0
  %689 = vmatprep.subr.mxu0 0.0
  %690 = vmatpush1.msra.mxu0 0.0
  %691 = vmatprep.subr.mxu0 0.0
  %692 = vmatpush1.msra.mxu0 0.0
  %693 = vmatprep.subr.mxu0 0.0
  %694 = vmatpush1.msra.mxu0 0.0
  %695 = vmatprep.subr.mxu0 0.0
  %696 = vmatpush1.msra.mxu0 0.0
  %697 = vmatprep.subr.mxu0 0.0
  %698 = vmatpush1.msra.mxu0 0.0
  %699 = vmatprep.subr.mxu0 0.0
  %700 = vmatpush1.msra.mxu0 0.0
  %701 = vmatprep.subr.mxu0 0.0
  %702 = vmatpush1.msra.mxu0 0.0
  %703 = vmatprep.subr.mxu0 0.0
  %704 = vmatpush1.msra.mxu0 0.0
  %705 = vmatprep.subr.mxu0 0.0
  %706 = vmatpush1.msra.mxu0 0.0
  %707 = vmatprep.subr.mxu0 0.0
  %708 = vmatpush1.msra.mxu0 0.0
  %709 = vmatprep.subr.mxu0 0.0
  %710 = vmatpush1.msra.mxu0 0.0
  %711 = vmatprep.mubr.f32.mxu0 0.0
  %712 = vmatmul.mubr.f32.gmra.mrb[0].mxu0 %v645
  %v713 = vpop.f32.mrb[0].mxu0
  %v714 = vadd.f32 0.0, %v713
  %v715 = vpop.f32.mrb[0].mxu0
  %v716 = vadd.f32 0.0, %v715
  %717 = vdwg.mxu0
  %v718 = vadd.f32 %v198, %v714
  %v719 = vadd.f32 %v200, %v716
  %v720 = vxor.u32 %v718, 2147483648
  %v721 = vxor.u32 %v719, 2147483648
  %v722 = vmul.f32 %v720, 1.442695
  %v723 = vpow.pop %v722
  %v724 = vmul.f32 %v721, 1.442695
  %v725 = vpow.pop %v724
  %v726 = vadd.f32 %v723, 1.0
  %v727 = vadd.f32 %v725, 1.0
  %v728 = vrcp.pop %v726
  %v729 = vmul.f32 1.0, %v728
  %v730 = vrcp.pop %v727
  %v731 = vmul.f32 1.0, %v730
  %v732 = vtanh.pop %v719
  %v733 = vmul.f32 %v729, %v637
  %735 = vrot.lane.b32.xlu0 %v732, 64
  %v736 = vpop.permute.xlu0 %735
  %v738 = vmul.f32 %v729, %v736
  %740 = vrot.lane.b32.xlu0 %v738, 64
  %v741 = vpop.permute.xlu0 %740
  %v743 = vadd.f32 %v733, %v741
  %v744 = vtanh.pop %v743
  %746 = vrot.lane.b32.xlu0 %v744, 64
  %v747 = vpop.permute.xlu0 %746
  %v749 = vmul.f32 %v731, %v747
  %v751 = vsel %vm82, %v749, 0
  %753 = vmatprep.subr.mxu0 %v28
  %754 = vmatpush1.msra.mxu0 %v27
  %755 = vmatprep.subr.mxu0 %v30
  %756 = vmatpush1.msra.mxu0 %v29
  %757 = vmatprep.subr.mxu0 %v32
  %758 = vmatpush1.msra.mxu0 %v31
  %759 = vmatprep.subr.mxu0 %v34
  %760 = vmatpush1.msra.mxu0 %v33
  %761 = vmatprep.subr.mxu0 %v36
  %762 = vmatpush1.msra.mxu0 %v35
  %763 = vmatprep.subr.mxu0 %v38
  %764 = vmatpush1.msra.mxu0 %v37
  %765 = vmatprep.subr.mxu0 %v40
  %766 = vmatpush1.msra.mxu0 %v39
  %767 = vmatprep.subr.mxu0 %v42
  %768 = vmatpush1.msra.mxu0 %v41
  %769 = vmatprep.subr.mxu0 0.0
  %770 = vmatpush1.msra.mxu0 0.0
  %771 = vmatprep.subr.mxu0 0.0
  %772 = vmatpush1.msra.mxu0 0.0
  %773 = vmatprep.subr.mxu0 0.0
  %774 = vmatpush1.msra.mxu0 0.0
  %775 = vmatprep.subr.mxu0 0.0
  %776 = vmatpush1.msra.mxu0 0.0
  %777 = vmatprep.subr.mxu0 0.0
  %778 = vmatpush1.msra.mxu0 0.0
  %779 = vmatprep.subr.mxu0 0.0
  %780 = vmatpush1.msra.mxu0 0.0
  %781 = vmatprep.subr.mxu0 0.0
  %782 = vmatpush1.msra.mxu0 0.0
  %783 = vmatprep.subr.mxu0 0.0
  %784 = vmatpush1.msra.mxu0 0.0
  %785 = vmatprep.subr.mxu0 0.0
  %786 = vmatpush1.msra.mxu0 0.0
  %787 = vmatprep.subr.mxu0 0.0
  %788 = vmatpush1.msra.mxu0 0.0
  %789 = vmatprep.subr.mxu0 0.0
  %790 = vmatpush1.msra.mxu0 0.0
  %791 = vmatprep.subr.mxu0 0.0
  %792 = vmatpush1.msra.mxu0 0.0
  %793 = vmatprep.subr.mxu0 0.0
  %794 = vmatpush1.msra.mxu0 0.0
  %795 = vmatprep.subr.mxu0 0.0
  %796 = vmatpush1.msra.mxu0 0.0
  %797 = vmatprep.subr.mxu0 0.0
  %798 = vmatpush1.msra.mxu0 0.0
  %799 = vmatprep.subr.mxu0 0.0
  %800 = vmatpush1.msra.mxu0 0.0
  %801 = vmatprep.subr.mxu0 0.0
  %802 = vmatpush1.msra.mxu0 0.0
  %803 = vmatprep.subr.mxu0 0.0
  %804 = vmatpush1.msra.mxu0 0.0
  %805 = vmatprep.subr.mxu0 0.0
  %806 = vmatpush1.msra.mxu0 0.0
  %807 = vmatprep.subr.mxu0 0.0
  %808 = vmatpush1.msra.mxu0 0.0
  %809 = vmatprep.subr.mxu0 0.0
  %810 = vmatpush1.msra.mxu0 0.0
  %811 = vmatprep.subr.mxu0 0.0
  %812 = vmatpush1.msra.mxu0 0.0
  %813 = vmatprep.subr.mxu0 0.0
  %814 = vmatpush1.msra.mxu0 0.0
  %815 = vmatprep.subr.mxu0 0.0
  %816 = vmatpush1.msra.mxu0 0.0
  %817 = vmatprep.mubr.f32.mxu0 0.0
  %818 = vmatmul.mubr.f32.gmra.mrb[0].mxu0 %v751
  %v819 = vpop.f32.mrb[0].mxu0
  %v820 = vadd.f32 0.0, %v819
  %v821 = vpop.f32.mrb[0].mxu0
  %v822 = vadd.f32 0.0, %v821
  %823 = vdwg.mxu0
  %v824 = vadd.f32 %v204, %v820
  %v825 = vadd.f32 %v206, %v822
  %v826 = vxor.u32 %v824, 2147483648
  %v827 = vxor.u32 %v825, 2147483648
  %v828 = vmul.f32 %v826, 1.442695
  %v829 = vpow.pop %v828
  %v830 = vmul.f32 %v827, 1.442695
  %v831 = vpow.pop %v830
  %v832 = vadd.f32 %v829, 1.0
  %v833 = vadd.f32 %v831, 1.0
  %v834 = vrcp.pop %v832
  %v835 = vmul.f32 1.0, %v834
  %v836 = vrcp.pop %v833
  %v837 = vmul.f32 1.0, %v836
  %v838 = vtanh.pop %v825
  %v839 = vmul.f32 %v835, %v743
  %841 = vrot.lane.b32.xlu0 %v838, 64
  %v842 = vpop.permute.xlu0 %841
  %v844 = vmul.f32 %v835, %v842
  %846 = vrot.lane.b32.xlu0 %v844, 64
  %v847 = vpop.permute.xlu0 %846
  %v849 = vadd.f32 %v839, %v847
  %v850 = vtanh.pop %v849
  %852 = vrot.lane.b32.xlu0 %v850, 64
  %v853 = vpop.permute.xlu0 %852
  %v855 = vmul.f32 %v837, %v853
  %v857 = vsel %vm82, %v855, 0
  %859 = vmatprep.subr.mxu0 %v28
  %860 = vmatpush1.msra.mxu0 %v27
  %861 = vmatprep.subr.mxu0 %v30
  %862 = vmatpush1.msra.mxu0 %v29
  %863 = vmatprep.subr.mxu0 %v32
  %864 = vmatpush1.msra.mxu0 %v31
  %865 = vmatprep.subr.mxu0 %v34
  %866 = vmatpush1.msra.mxu0 %v33
  %867 = vmatprep.subr.mxu0 %v36
  %868 = vmatpush1.msra.mxu0 %v35
  %869 = vmatprep.subr.mxu0 %v38
  %870 = vmatpush1.msra.mxu0 %v37
  %871 = vmatprep.subr.mxu0 %v40
  %872 = vmatpush1.msra.mxu0 %v39
  %873 = vmatprep.subr.mxu0 %v42
  %874 = vmatpush1.msra.mxu0 %v41
  %875 = vmatprep.subr.mxu0 0.0
  %876 = vmatpush1.msra.mxu0 0.0
  %877 = vmatprep.subr.mxu0 0.0
  %878 = vmatpush1.msra.mxu0 0.0
  %879 = vmatprep.subr.mxu0 0.0
  %880 = vmatpush1.msra.mxu0 0.0
  %881 = vmatprep.subr.mxu0 0.0
  %882 = vmatpush1.msra.mxu0 0.0
  %883 = vmatprep.subr.mxu0 0.0
  %884 = vmatpush1.msra.mxu0 0.0
  %885 = vmatprep.subr.mxu0 0.0
  %886 = vmatpush1.msra.mxu0 0.0
  %887 = vmatprep.subr.mxu0 0.0
  %888 = vmatpush1.msra.mxu0 0.0
  %889 = vmatprep.subr.mxu0 0.0
  %890 = vmatpush1.msra.mxu0 0.0
  %891 = vmatprep.subr.mxu0 0.0
  %892 = vmatpush1.msra.mxu0 0.0
  %893 = vmatprep.subr.mxu0 0.0
  %894 = vmatpush1.msra.mxu0 0.0
  %895 = vmatprep.subr.mxu0 0.0
  %896 = vmatpush1.msra.mxu0 0.0
  %897 = vmatprep.subr.mxu0 0.0
  %898 = vmatpush1.msra.mxu0 0.0
  %899 = vmatprep.subr.mxu0 0.0
  %900 = vmatpush1.msra.mxu0 0.0
  %901 = vmatprep.subr.mxu0 0.0
  %902 = vmatpush1.msra.mxu0 0.0
  %903 = vmatprep.subr.mxu0 0.0
  %904 = vmatpush1.msra.mxu0 0.0
  %905 = vmatprep.subr.mxu0 0.0
  %906 = vmatpush1.msra.mxu0 0.0
  %907 = vmatprep.subr.mxu0 0.0
  %908 = vmatpush1.msra.mxu0 0.0
  %909 = vmatprep.subr.mxu0 0.0
  %910 = vmatpush1.msra.mxu0 0.0
  %911 = vmatprep.subr.mxu0 0.0
  %912 = vmatpush1.msra.mxu0 0.0
  %913 = vmatprep.subr.mxu0 0.0
  %914 = vmatpush1.msra.mxu0 0.0
  %915 = vmatprep.subr.mxu0 0.0
  %916 = vmatpush1.msra.mxu0 0.0
  %917 = vmatprep.subr.mxu0 0.0
  %918 = vmatpush1.msra.mxu0 0.0
  %919 = vmatprep.subr.mxu0 0.0
  %920 = vmatpush1.msra.mxu0 0.0
  %921 = vmatprep.subr.mxu0 0.0
  %922 = vmatpush1.msra.mxu0 0.0
  %923 = vmatprep.mubr.f32.mxu0 0.0
  %924 = vmatmul.mubr.f32.gmra.mrb[0].mxu0 %v857
  %v925 = vpop.f32.mrb[0].mxu0
  %v926 = vadd.f32 0.0, %v925
  %v927 = vpop.f32.mrb[0].mxu0
  %v928 = vadd.f32 0.0, %v927
  %929 = vdwg.mxu0
  %v930 = vadd.f32 %v210, %v926
  %v931 = vadd.f32 %v212, %v928
  %v932 = vxor.u32 %v930, 2147483648
  %v933 = vxor.u32 %v931, 2147483648
  %v934 = vmul.f32 %v932, 1.442695
  %v935 = vpow.pop %v934
  %v936 = vmul.f32 %v933, 1.442695
  %v937 = vpow.pop %v936
  %v938 = vadd.f32 %v935, 1.0
  %v939 = vadd.f32 %v937, 1.0
  %v940 = vrcp.pop %v938
  %v941 = vmul.f32 1.0, %v940
  %v942 = vrcp.pop %v939
  %v943 = vmul.f32 1.0, %v942
  %v944 = vtanh.pop %v931
  %v945 = vmul.f32 %v941, %v849
  %947 = vrot.lane.b32.xlu0 %v944, 64
  %v948 = vpop.permute.xlu0 %947
  %v950 = vmul.f32 %v941, %v948
  %952 = vrot.lane.b32.xlu0 %v950, 64
  %v953 = vpop.permute.xlu0 %952
  %v955 = vadd.f32 %v945, %v953
  %v956 = vtanh.pop %v955
  %958 = vrot.lane.b32.xlu0 %v956, 64
  %v959 = vpop.permute.xlu0 %958
  %v961 = vmul.f32 %v943, %v959
  %v963 = vsel %vm82, %v961, 0
  %965 = vmatprep.subr.mxu0 %v28
  %966 = vmatpush1.msra.mxu0 %v27
  %967 = vmatprep.subr.mxu0 %v30
  %968 = vmatpush1.msra.mxu0 %v29
  %969 = vmatprep.subr.mxu0 %v32
  %970 = vmatpush1.msra.mxu0 %v31
  %971 = vmatprep.subr.mxu0 %v34
  %972 = vmatpush1.msra.mxu0 %v33
  %973 = vmatprep.subr.mxu0 %v36
  %974 = vmatpush1.msra.mxu0 %v35
  %975 = vmatprep.subr.mxu0 %v38
  %976 = vmatpush1.msra.mxu0 %v37
  %977 = vmatprep.subr.mxu0 %v40
  %978 = vmatpush1.msra.mxu0 %v39
  %979 = vmatprep.subr.mxu0 %v42
  %980 = vmatpush1.msra.mxu0 %v41
  %981 = vmatprep.subr.mxu0 0.0
  %982 = vmatpush1.msra.mxu0 0.0
  %983 = vmatprep.subr.mxu0 0.0
  %984 = vmatpush1.msra.mxu0 0.0
  %985 = vmatprep.subr.mxu0 0.0
  %986 = vmatpush1.msra.mxu0 0.0
  %987 = vmatprep.subr.mxu0 0.0
  %988 = vmatpush1.msra.mxu0 0.0
  %989 = vmatprep.subr.mxu0 0.0
  %990 = vmatpush1.msra.mxu0 0.0
  %991 = vmatprep.subr.mxu0 0.0
  %992 = vmatpush1.msra.mxu0 0.0
  %993 = vmatprep.subr.mxu0 0.0
  %994 = vmatpush1.msra.mxu0 0.0
  %995 = vmatprep.subr.mxu0 0.0
  %996 = vmatpush1.msra.mxu0 0.0
  %997 = vmatprep.subr.mxu0 0.0
  %998 = vmatpush1.msra.mxu0 0.0
  %999 = vmatprep.subr.mxu0 0.0
  %1000 = vmatpush1.msra.mxu0 0.0
  %1001 = vmatprep.subr.mxu0 0.0
  %1002 = vmatpush1.msra.mxu0 0.0
  %1003 = vmatprep.subr.mxu0 0.0
  %1004 = vmatpush1.msra.mxu0 0.0
  %1005 = vmatprep.subr.mxu0 0.0
  %1006 = vmatpush1.msra.mxu0 0.0
  %1007 = vmatprep.subr.mxu0 0.0
  %1008 = vmatpush1.msra.mxu0 0.0
  %1009 = vmatprep.subr.mxu0 0.0
  %1010 = vmatpush1.msra.mxu0 0.0
  %1011 = vmatprep.subr.mxu0 0.0
  %1012 = vmatpush1.msra.mxu0 0.0
  %1013 = vmatprep.subr.mxu0 0.0
  %1014 = vmatpush1.msra.mxu0 0.0
  %1015 = vmatprep.subr.mxu0 0.0
  %1016 = vmatpush1.msra.mxu0 0.0
  %1017 = vmatprep.subr.mxu0 0.0
  %1018 = vmatpush1.msra.mxu0 0.0
  %1019 = vmatprep.subr.mxu0 0.0
  %1020 = vmatpush1.msra.mxu0 0.0
  %1021 = vmatprep.subr.mxu0 0.0
  %1022 = vmatpush1.msra.mxu0 0.0
  %1023 = vmatprep.subr.mxu0 0.0
  %1024 = vmatpush1.msra.mxu0 0.0
  %1025 = vmatprep.subr.mxu0 0.0
  %1026 = vmatpush1.msra.mxu0 0.0
  %1027 = vmatprep.subr.mxu0 0.0
  %1028 = vmatpush1.msra.mxu0 0.0
  %1029 = vmatprep.mubr.f32.mxu0 0.0
  %1030 = vmatmul.mubr.f32.gmra.mrb[0].mxu0 %v963
  %v1031 = vpop.f32.mrb[0].mxu0
  %v1032 = vadd.f32 0.0, %v1031
  %v1033 = vpop.f32.mrb[0].mxu0
  %v1034 = vadd.f32 0.0, %v1033
  %1035 = vdwg.mxu0
  %v1036 = vadd.f32 %v216, %v1032
  %v1037 = vadd.f32 %v218, %v1034
  %v1038 = vxor.u32 %v1036, 2147483648
  %v1039 = vxor.u32 %v1037, 2147483648
  %v1040 = vmul.f32 %v1038, 1.442695
  %v1041 = vpow.pop %v1040
  %v1042 = vmul.f32 %v1039, 1.442695
  %v1043 = vpow.pop %v1042
  %v1044 = vadd.f32 %v1041, 1.0
  %v1045 = vadd.f32 %v1043, 1.0
  %v1046 = vrcp.pop %v1044
  %v1047 = vmul.f32 1.0, %v1046
  %v1048 = vrcp.pop %v1045
  %v1049 = vmul.f32 1.0, %v1048
  %v1050 = vtanh.pop %v1037
  %v1051 = vmul.f32 %v1047, %v955
  %1053 = vrot.lane.b32.xlu0 %v1050, 64
  %v1054 = vpop.permute.xlu0 %1053
  %v1056 = vmul.f32 %v1047, %v1054
  %1058 = vrot.lane.b32.xlu0 %v1056, 64
  %v1059 = vpop.permute.xlu0 %1058
  %v1061 = vadd.f32 %v1051, %v1059
  %v1062 = vtanh.pop %v1061
  %1064 = vrot.lane.b32.xlu0 %v1062, 64
  %v1065 = vpop.permute.xlu0 %1064
  %v1067 = vmul.f32 %v1049, %v1065
  %vm1068 = vcmask 261120
  %v1069 = vsel %vm1068, %v325, %v1067
  %v1070 = vsel %vm1068, %v431, %v961
  %v1071 = vsel %vm1068, %v537, %v855
  %v1072 = vsel %vm1068, %v643, %v749
  %v1073 = vsel %vm1068, %v749, %v643
  %v1074 = vsel %vm1068, %v855, %v537
  %v1075 = vsel %vm1068, %v961, %v431
  %v1076 = vsel %vm1068, %v1067, %v325
  %v1078 = vsel %vm82, %v1069, 0
  %v1081 = vsel %vm82, %v1070, 0
  %v1084 = vsel %vm82, %v1071, 0
  %v1087 = vsel %vm82, %v1072, 0
  %v1090 = vsel %vm82, %v1073, 0
  %v1093 = vsel %vm82, %v1074, 0
  %v1096 = vsel %vm82, %v1075, 0
  %v1099 = vsel %vm82, %v1076, 0
  %1101 = vmatprep.subr.mxu0 0.0
  %1102 = vmatpush1.msra.mxu0 %v45
  %1103 = vmatprep.subr.mxu0 0.0
  %1104 = vmatpush1.msra.mxu0 %v46
  %1105 = vmatprep.subr.mxu0 0.0
  %1106 = vmatpush1.msra.mxu0 %v47
  %1107 = vmatprep.subr.mxu0 0.0
  %1108 = vmatpush1.msra.mxu0 %v48
  %1109 = vmatprep.subr.mxu0 0.0
  %1110 = vmatpush1.msra.mxu0 %v49
  %1111 = vmatprep.subr.mxu0 0.0
  %1112 = vmatpush1.msra.mxu0 %v50
  %1113 = vmatprep.subr.mxu0 0.0
  %1114 = vmatpush1.msra.mxu0 %v51
  %1115 = vmatprep.subr.mxu0 0.0
  %1116 = vmatpush1.msra.mxu0 %v52
  %1117 = vmatprep.subr.mxu0 0.0
  %1118 = vmatpush1.msra.mxu0 0.0
  %1119 = vmatprep.subr.mxu0 0.0
  %1120 = vmatpush1.msra.mxu0 0.0
  %1121 = vmatprep.subr.mxu0 0.0
  %1122 = vmatpush1.msra.mxu0 0.0
  %1123 = vmatprep.subr.mxu0 0.0
  %1124 = vmatpush1.msra.mxu0 0.0
  %1125 = vmatprep.subr.mxu0 0.0
  %1126 = vmatpush1.msra.mxu0 0.0
  %1127 = vmatprep.subr.mxu0 0.0
  %1128 = vmatpush1.msra.mxu0 0.0
  %1129 = vmatprep.subr.mxu0 0.0
  %1130 = vmatpush1.msra.mxu0 0.0
  %1131 = vmatprep.subr.mxu0 0.0
  %1132 = vmatpush1.msra.mxu0 0.0
  %1133 = vmatprep.subr.mxu0 0.0
  %1134 = vmatpush1.msra.mxu0 0.0
  %1135 = vmatprep.subr.mxu0 0.0
  %1136 = vmatpush1.msra.mxu0 0.0
  %1137 = vmatprep.subr.mxu0 0.0
  %1138 = vmatpush1.msra.mxu0 0.0
  %1139 = vmatprep.subr.mxu0 0.0
  %1140 = vmatpush1.msra.mxu0 0.0
  %1141 = vmatprep.subr.mxu0 0.0
  %1142 = vmatpush1.msra.mxu0 0.0
  %1143 = vmatprep.subr.mxu0 0.0
  %1144 = vmatpush1.msra.mxu0 0.0
  %1145 = vmatprep.subr.mxu0 0.0
  %1146 = vmatpush1.msra.mxu0 0.0
  %1147 = vmatprep.subr.mxu0 0.0
  %1148 = vmatpush1.msra.mxu0 0.0
  %1149 = vmatprep.subr.mxu0 0.0
  %1150 = vmatpush1.msra.mxu0 0.0
  %1151 = vmatprep.subr.mxu0 0.0
  %1152 = vmatpush1.msra.mxu0 0.0
  %1153 = vmatprep.subr.mxu0 0.0
  %1154 = vmatpush1.msra.mxu0 0.0
  %1155 = vmatprep.subr.mxu0 0.0
  %1156 = vmatpush1.msra.mxu0 0.0
  %1157 = vmatprep.subr.mxu0 0.0
  %1158 = vmatpush1.msra.mxu0 0.0
  %1159 = vmatprep.subr.mxu0 0.0
  %1160 = vmatpush1.msra.mxu0 0.0
  %1161 = vmatprep.subr.mxu0 0.0
  %1162 = vmatpush1.msra.mxu0 0.0
  %1163 = vmatprep.subr.mxu0 0.0
  %1164 = vmatpush1.msra.mxu0 0.0
  %1165 = vmatprep.mubr.f32.mxu0 0.0
  %1166 = vmatmul.mubr.f32.gmra.mrb[0].mxu0 %v1078
  %v1167 = vpop.f32.mrb[0].mxu0
  %v1168 = vadd.f32 %v57, %v1167
  %v1169 = vpop.f32.mrb[0].mxu0
  %1170 = vmatprep.mubr.f32.mxu0 0.0
  %1171 = vmatmul.mubr.f32.gmra.mrb[0].mxu0 %v1081
  %v1172 = vpop.f32.mrb[0].mxu0
  %v1173 = vadd.f32 %v57, %v1172
  %v1174 = vpop.f32.mrb[0].mxu0
  %1175 = vmatprep.mubr.f32.mxu0 0.0
  %1176 = vmatmul.mubr.f32.gmra.mrb[0].mxu0 %v1084
  %v1177 = vpop.f32.mrb[0].mxu0
  %v1178 = vadd.f32 %v57, %v1177
  %v1179 = vpop.f32.mrb[0].mxu0
  %1180 = vmatprep.mubr.f32.mxu0 0.0
  %1181 = vmatmul.mubr.f32.gmra.mrb[0].mxu0 %v1087
  %v1182 = vpop.f32.mrb[0].mxu0
  %v1183 = vadd.f32 %v57, %v1182
  %v1184 = vpop.f32.mrb[0].mxu0
  %1185 = vmatprep.mubr.f32.mxu0 0.0
  %1186 = vmatmul.mubr.f32.gmra.mrb[0].mxu0 %v1090
  %v1187 = vpop.f32.mrb[0].mxu0
  %v1188 = vadd.f32 %v57, %v1187
  %v1189 = vpop.f32.mrb[0].mxu0
  %1190 = vmatprep.mubr.f32.mxu0 0.0
  %1191 = vmatmul.mubr.f32.gmra.mrb[0].mxu0 %v1093
  %v1192 = vpop.f32.mrb[0].mxu0
  %v1193 = vadd.f32 %v57, %v1192
  %v1194 = vpop.f32.mrb[0].mxu0
  %1195 = vmatprep.mubr.f32.mxu0 0.0
  %1196 = vmatmul.mubr.f32.gmra.mrb[0].mxu0 %v1096
  %v1197 = vpop.f32.mrb[0].mxu0
  %v1198 = vadd.f32 %v57, %v1197
  %v1199 = vpop.f32.mrb[0].mxu0
  %1200 = vmatprep.mubr.f32.mxu0 0.0
  %1201 = vmatmul.mubr.f32.gmra.mrb[0].mxu0 %v1099
  %v1202 = vpop.f32.mrb[0].mxu0
  %v1203 = vadd.f32 %v57, %v1202
  %v1204 = vpop.f32.mrb[0].mxu0
  %1205 = vdwg.mxu0
  %v1206 = vsel %vm1068, 0.0, 0
  %1208 = vmatprep.subr.mxu0 0.0
  %1209 = vmatpush1.msra.mxu0 %v53
  %1210 = vmatprep.subr.mxu0 0.0
  %1211 = vmatpush1.msra.mxu0 %v54
  %1212 = vmatprep.subr.mxu0 0.0
  %1213 = vmatpush1.msra.mxu0 %v55
  %1214 = vmatprep.subr.mxu0 0.0
  %1215 = vmatpush1.msra.mxu0 %v56
  %1216 = vmatprep.subr.mxu0 0.0
  %1217 = vmatpush1.msra.mxu0 0.0
  %1218 = vmatprep.subr.mxu0 0.0
  %1219 = vmatpush1.msra.mxu0 0.0
  %1220 = vmatprep.subr.mxu0 0.0
  %1221 = vmatpush1.msra.mxu0 0.0
  %1222 = vmatprep.subr.mxu0 0.0
  %1223 = vmatpush1.msra.mxu0 0.0
  %1224 = vmatprep.subr.mxu0 0.0
  %1225 = vmatpush1.msra.mxu0 0.0
  %1226 = vmatprep.subr.mxu0 0.0
  %1227 = vmatpush1.msra.mxu0 0.0
  %1228 = vmatprep.subr.mxu0 0.0
  %1229 = vmatpush1.msra.mxu0 0.0
  %1230 = vmatprep.subr.mxu0 0.0
  %1231 = vmatpush1.msra.mxu0 0.0
  %1232 = vmatprep.subr.mxu0 0.0
  %1233 = vmatpush1.msra.mxu0 0.0
  %1234 = vmatprep.subr.mxu0 0.0
  %1235 = vmatpush1.msra.mxu0 0.0
  %1236 = vmatprep.subr.mxu0 0.0
  %1237 = vmatpush1.msra.mxu0 0.0
  %1238 = vmatprep.subr.mxu0 0.0
  %1239 = vmatpush1.msra.mxu0 0.0
  %1240 = vmatprep.subr.mxu0 0.0
  %1241 = vmatpush1.msra.mxu0 0.0
  %1242 = vmatprep.subr.mxu0 0.0
  %1243 = vmatpush1.msra.mxu0 0.0
  %1244 = vmatprep.subr.mxu0 0.0
  %1245 = vmatpush1.msra.mxu0 0.0
  %1246 = vmatprep.subr.mxu0 0.0
  %1247 = vmatpush1.msra.mxu0 0.0
  %1248 = vmatprep.subr.mxu0 0.0
  %1249 = vmatpush1.msra.mxu0 0.0
  %1250 = vmatprep.subr.mxu0 0.0
  %1251 = vmatpush1.msra.mxu0 0.0
  %1252 = vmatprep.subr.mxu0 0.0
  %1253 = vmatpush1.msra.mxu0 0.0
  %1254 = vmatprep.subr.mxu0 0.0
  %1255 = vmatpush1.msra.mxu0 0.0
  %1256 = vmatprep.subr.mxu0 0.0
  %1257 = vmatpush1.msra.mxu0 0.0
  %1258 = vmatprep.subr.mxu0 0.0
  %1259 = vmatpush1.msra.mxu0 0.0
  %1260 = vmatprep.subr.mxu0 0.0
  %1261 = vmatpush1.msra.mxu0 0.0
  %1262 = vmatprep.subr.mxu0 0.0
  %1263 = vmatpush1.msra.mxu0 0.0
  %1264 = vmatprep.subr.mxu0 0.0
  %1265 = vmatpush1.msra.mxu0 0.0
  %1266 = vmatprep.subr.mxu0 0.0
  %1267 = vmatpush1.msra.mxu0 0.0
  %1268 = vmatprep.subr.mxu0 0.0
  %1269 = vmatpush1.msra.mxu0 0.0
  %1270 = vmatprep.subr.mxu0 0.0
  %1271 = vmatpush1.msra.mxu0 0.0
  %1272 = vmatprep.mubr.f32.mxu0 0.0
  %1273 = vmatmul.mubr.f32.gmra.mrb[0].mxu0 %v1206
  %v1274 = vpop.f32.mrb[0].mxu0
  %v1275 = vadd.f32 0.0, %v1274
  %v1276 = vpop.f32.mrb[0].mxu0
  %1277 = vdwg.mxu0
  %v1278 = vadd.f32 %v1168, %v1275
  %v1279 = vxor.u32 %v1278, 2147483648
  %v1280 = vmul.f32 %v1279, 1.442695
  %v1281 = vpow.pop %v1280
  %v1282 = vadd.f32 %v1281, 1.0
  %v1283 = vrcp.pop %v1282
  %v1284 = vmul.f32 1.0, %v1283
  %v1285 = vtanh.pop %v1278
  %v1286 = vmul.f32 %v1284, 0.0
  %1288 = vrot.lane.b32.xlu0 %v1285, 32
  %v1289 = vpop.permute.xlu0 %1288
  %v1291 = vmul.f32 %v1284, %v1289
  %1293 = vrot.lane.b32.xlu0 %v1291, 32
  %v1294 = vpop.permute.xlu0 %1293
  %v1296 = vadd.f32 %v1286, %v1294
  %v1297 = vtanh.pop %v1296
  %1299 = vrot.lane.b32.xlu0 %v1297, 32
  %v1300 = vpop.permute.xlu0 %1299
  %v1302 = vmul.f32 %v1284, %v1300
  %1304 = vrot.lane.b32.xlu0 %v1302, 64
  %v1305 = vpop.permute.xlu0 %1304
  %v1306 = vsel %vm1068, %v1305, 0
  %1308 = vmatprep.subr.mxu0 0.0
  %1309 = vmatpush1.msra.mxu0 %v53
  %1310 = vmatprep.subr.mxu0 0.0
  %1311 = vmatpush1.msra.mxu0 %v54
  %1312 = vmatprep.subr.mxu0 0.0
  %1313 = vmatpush1.msra.mxu0 %v55
  %1314 = vmatprep.subr.mxu0 0.0
  %1315 = vmatpush1.msra.mxu0 %v56
  %1316 = vmatprep.subr.mxu0 0.0
  %1317 = vmatpush1.msra.mxu0 0.0
  %1318 = vmatprep.subr.mxu0 0.0
  %1319 = vmatpush1.msra.mxu0 0.0
  %1320 = vmatprep.subr.mxu0 0.0
  %1321 = vmatpush1.msra.mxu0 0.0
  %1322 = vmatprep.subr.mxu0 0.0
  %1323 = vmatpush1.msra.mxu0 0.0
  %1324 = vmatprep.subr.mxu0 0.0
  %1325 = vmatpush1.msra.mxu0 0.0
  %1326 = vmatprep.subr.mxu0 0.0
  %1327 = vmatpush1.msra.mxu0 0.0
  %1328 = vmatprep.subr.mxu0 0.0
  %1329 = vmatpush1.msra.mxu0 0.0
  %1330 = vmatprep.subr.mxu0 0.0
  %1331 = vmatpush1.msra.mxu0 0.0
  %1332 = vmatprep.subr.mxu0 0.0
  %1333 = vmatpush1.msra.mxu0 0.0
  %1334 = vmatprep.subr.mxu0 0.0
  %1335 = vmatpush1.msra.mxu0 0.0
  %1336 = vmatprep.subr.mxu0 0.0
  %1337 = vmatpush1.msra.mxu0 0.0
  %1338 = vmatprep.subr.mxu0 0.0
  %1339 = vmatpush1.msra.mxu0 0.0
  %1340 = vmatprep.subr.mxu0 0.0
  %1341 = vmatpush1.msra.mxu0 0.0
  %1342 = vmatprep.subr.mxu0 0.0
  %1343 = vmatpush1.msra.mxu0 0.0
  %1344 = vmatprep.subr.mxu0 0.0
  %1345 = vmatpush1.msra.mxu0 0.0
  %1346 = vmatprep.subr.mxu0 0.0
  %1347 = vmatpush1.msra.mxu0 0.0
  %1348 = vmatprep.subr.mxu0 0.0
  %1349 = vmatpush1.msra.mxu0 0.0
  %1350 = vmatprep.subr.mxu0 0.0
  %1351 = vmatpush1.msra.mxu0 0.0
  %1352 = vmatprep.subr.mxu0 0.0
  %1353 = vmatpush1.msra.mxu0 0.0
  %1354 = vmatprep.subr.mxu0 0.0
  %1355 = vmatpush1.msra.mxu0 0.0
  %1356 = vmatprep.subr.mxu0 0.0
  %1357 = vmatpush1.msra.mxu0 0.0
  %1358 = vmatprep.subr.mxu0 0.0
  %1359 = vmatpush1.msra.mxu0 0.0
  %1360 = vmatprep.subr.mxu0 0.0
  %1361 = vmatpush1.msra.mxu0 0.0
  %1362 = vmatprep.subr.mxu0 0.0
  %1363 = vmatpush1.msra.mxu0 0.0
  %1364 = vmatprep.subr.mxu0 0.0
  %1365 = vmatpush1.msra.mxu0 0.0
  %1366 = vmatprep.subr.mxu0 0.0
  %1367 = vmatpush1.msra.mxu0 0.0
  %1368 = vmatprep.subr.mxu0 0.0
  %1369 = vmatpush1.msra.mxu0 0.0
  %1370 = vmatprep.subr.mxu0 0.0
  %1371 = vmatpush1.msra.mxu0 0.0
  %1372 = vmatprep.mubr.f32.mxu0 0.0
  %1373 = vmatmul.mubr.f32.gmra.mrb[0].mxu0 %v1306
  %v1374 = vpop.f32.mrb[0].mxu0
  %v1375 = vadd.f32 0.0, %v1374
  %v1376 = vpop.f32.mrb[0].mxu0
  %1377 = vdwg.mxu0
  %v1378 = vadd.f32 %v1173, %v1375
  %v1379 = vxor.u32 %v1378, 2147483648
  %v1380 = vmul.f32 %v1379, 1.442695
  %v1381 = vpow.pop %v1380
  %v1382 = vadd.f32 %v1381, 1.0
  %v1383 = vrcp.pop %v1382
  %v1384 = vmul.f32 1.0, %v1383
  %v1385 = vtanh.pop %v1378
  %v1386 = vmul.f32 %v1384, %v1296
  %1388 = vrot.lane.b32.xlu0 %v1385, 32
  %v1389 = vpop.permute.xlu0 %1388
  %v1391 = vmul.f32 %v1384, %v1389
  %1393 = vrot.lane.b32.xlu0 %v1391, 32
  %v1394 = vpop.permute.xlu0 %1393
  %v1396 = vadd.f32 %v1386, %v1394
  %v1397 = vtanh.pop %v1396
  %1399 = vrot.lane.b32.xlu0 %v1397, 32
  %v1400 = vpop.permute.xlu0 %1399
  %v1402 = vmul.f32 %v1384, %v1400
  %1404 = vrot.lane.b32.xlu0 %v1402, 64
  %v1405 = vpop.permute.xlu0 %1404
  %v1406 = vsel %vm1068, %v1405, 0
  %1408 = vmatprep.subr.mxu0 0.0
  %1409 = vmatpush1.msra.mxu0 %v53
  %1410 = vmatprep.subr.mxu0 0.0
  %1411 = vmatpush1.msra.mxu0 %v54
  %1412 = vmatprep.subr.mxu0 0.0
  %1413 = vmatpush1.msra.mxu0 %v55
  %1414 = vmatprep.subr.mxu0 0.0
  %1415 = vmatpush1.msra.mxu0 %v56
  %1416 = vmatprep.subr.mxu0 0.0
  %1417 = vmatpush1.msra.mxu0 0.0
  %1418 = vmatprep.subr.mxu0 0.0
  %1419 = vmatpush1.msra.mxu0 0.0
  %1420 = vmatprep.subr.mxu0 0.0
  %1421 = vmatpush1.msra.mxu0 0.0
  %1422 = vmatprep.subr.mxu0 0.0
  %1423 = vmatpush1.msra.mxu0 0.0
  %1424 = vmatprep.subr.mxu0 0.0
  %1425 = vmatpush1.msra.mxu0 0.0
  %1426 = vmatprep.subr.mxu0 0.0
  %1427 = vmatpush1.msra.mxu0 0.0
  %1428 = vmatprep.subr.mxu0 0.0
  %1429 = vmatpush1.msra.mxu0 0.0
  %1430 = vmatprep.subr.mxu0 0.0
  %1431 = vmatpush1.msra.mxu0 0.0
  %1432 = vmatprep.subr.mxu0 0.0
  %1433 = vmatpush1.msra.mxu0 0.0
  %1434 = vmatprep.subr.mxu0 0.0
  %1435 = vmatpush1.msra.mxu0 0.0
  %1436 = vmatprep.subr.mxu0 0.0
  %1437 = vmatpush1.msra.mxu0 0.0
  %1438 = vmatprep.subr.mxu0 0.0
  %1439 = vmatpush1.msra.mxu0 0.0
  %1440 = vmatprep.subr.mxu0 0.0
  %1441 = vmatpush1.msra.mxu0 0.0
  %1442 = vmatprep.subr.mxu0 0.0
  %1443 = vmatpush1.msra.mxu0 0.0
  %1444 = vmatprep.subr.mxu0 0.0
  %1445 = vmatpush1.msra.mxu0 0.0
  %1446 = vmatprep.subr.mxu0 0.0
  %1447 = vmatpush1.msra.mxu0 0.0
  %1448 = vmatprep.subr.mxu0 0.0
  %1449 = vmatpush1.msra.mxu0 0.0
  %1450 = vmatprep.subr.mxu0 0.0
  %1451 = vmatpush1.msra.mxu0 0.0
  %1452 = vmatprep.subr.mxu0 0.0
  %1453 = vmatpush1.msra.mxu0 0.0
  %1454 = vmatprep.subr.mxu0 0.0
  %1455 = vmatpush1.msra.mxu0 0.0
  %1456 = vmatprep.subr.mxu0 0.0
  %1457 = vmatpush1.msra.mxu0 0.0
  %1458 = vmatprep.subr.mxu0 0.0
  %1459 = vmatpush1.msra.mxu0 0.0
  %1460 = vmatprep.subr.mxu0 0.0
  %1461 = vmatpush1.msra.mxu0 0.0
  %1462 = vmatprep.subr.mxu0 0.0
  %1463 = vmatpush1.msra.mxu0 0.0
  %1464 = vmatprep.subr.mxu0 0.0
  %1465 = vmatpush1.msra.mxu0 0.0
  %1466 = vmatprep.subr.mxu0 0.0
  %1467 = vmatpush1.msra.mxu0 0.0
  %1468 = vmatprep.subr.mxu0 0.0
  %1469 = vmatpush1.msra.mxu0 0.0
  %1470 = vmatprep.subr.mxu0 0.0
  %1471 = vmatpush1.msra.mxu0 0.0
  %1472 = vmatprep.mubr.f32.mxu0 0.0
  %1473 = vmatmul.mubr.f32.gmra.mrb[0].mxu0 %v1406
  %v1474 = vpop.f32.mrb[0].mxu0
  %v1475 = vadd.f32 0.0, %v1474
  %v1476 = vpop.f32.mrb[0].mxu0
  %1477 = vdwg.mxu0
  %v1478 = vadd.f32 %v1178, %v1475
  %v1479 = vxor.u32 %v1478, 2147483648
  %v1480 = vmul.f32 %v1479, 1.442695
  %v1481 = vpow.pop %v1480
  %v1482 = vadd.f32 %v1481, 1.0
  %v1483 = vrcp.pop %v1482
  %v1484 = vmul.f32 1.0, %v1483
  %v1485 = vtanh.pop %v1478
  %v1486 = vmul.f32 %v1484, %v1396
  %1488 = vrot.lane.b32.xlu0 %v1485, 32
  %v1489 = vpop.permute.xlu0 %1488
  %v1491 = vmul.f32 %v1484, %v1489
  %1493 = vrot.lane.b32.xlu0 %v1491, 32
  %v1494 = vpop.permute.xlu0 %1493
  %v1496 = vadd.f32 %v1486, %v1494
  %v1497 = vtanh.pop %v1496
  %1499 = vrot.lane.b32.xlu0 %v1497, 32
  %v1500 = vpop.permute.xlu0 %1499
  %v1502 = vmul.f32 %v1484, %v1500
  %1504 = vrot.lane.b32.xlu0 %v1502, 64
  %v1505 = vpop.permute.xlu0 %1504
  %v1506 = vsel %vm1068, %v1505, 0
  %1508 = vmatprep.subr.mxu0 0.0
  %1509 = vmatpush1.msra.mxu0 %v53
  %1510 = vmatprep.subr.mxu0 0.0
  %1511 = vmatpush1.msra.mxu0 %v54
  %1512 = vmatprep.subr.mxu0 0.0
  %1513 = vmatpush1.msra.mxu0 %v55
  %1514 = vmatprep.subr.mxu0 0.0
  %1515 = vmatpush1.msra.mxu0 %v56
  %1516 = vmatprep.subr.mxu0 0.0
  %1517 = vmatpush1.msra.mxu0 0.0
  %1518 = vmatprep.subr.mxu0 0.0
  %1519 = vmatpush1.msra.mxu0 0.0
  %1520 = vmatprep.subr.mxu0 0.0
  %1521 = vmatpush1.msra.mxu0 0.0
  %1522 = vmatprep.subr.mxu0 0.0
  %1523 = vmatpush1.msra.mxu0 0.0
  %1524 = vmatprep.subr.mxu0 0.0
  %1525 = vmatpush1.msra.mxu0 0.0
  %1526 = vmatprep.subr.mxu0 0.0
  %1527 = vmatpush1.msra.mxu0 0.0
  %1528 = vmatprep.subr.mxu0 0.0
  %1529 = vmatpush1.msra.mxu0 0.0
  %1530 = vmatprep.subr.mxu0 0.0
  %1531 = vmatpush1.msra.mxu0 0.0
  %1532 = vmatprep.subr.mxu0 0.0
  %1533 = vmatpush1.msra.mxu0 0.0
  %1534 = vmatprep.subr.mxu0 0.0
  %1535 = vmatpush1.msra.mxu0 0.0
  %1536 = vmatprep.subr.mxu0 0.0
  %1537 = vmatpush1.msra.mxu0 0.0
  %1538 = vmatprep.subr.mxu0 0.0
  %1539 = vmatpush1.msra.mxu0 0.0
  %1540 = vmatprep.subr.mxu0 0.0
  %1541 = vmatpush1.msra.mxu0 0.0
  %1542 = vmatprep.subr.mxu0 0.0
  %1543 = vmatpush1.msra.mxu0 0.0
  %1544 = vmatprep.subr.mxu0 0.0
  %1545 = vmatpush1.msra.mxu0 0.0
  %1546 = vmatprep.subr.mxu0 0.0
  %1547 = vmatpush1.msra.mxu0 0.0
  %1548 = vmatprep.subr.mxu0 0.0
  %1549 = vmatpush1.msra.mxu0 0.0
  %1550 = vmatprep.subr.mxu0 0.0
  %1551 = vmatpush1.msra.mxu0 0.0
  %1552 = vmatprep.subr.mxu0 0.0
  %1553 = vmatpush1.msra.mxu0 0.0
  %1554 = vmatprep.subr.mxu0 0.0
  %1555 = vmatpush1.msra.mxu0 0.0
  %1556 = vmatprep.subr.mxu0 0.0
  %1557 = vmatpush1.msra.mxu0 0.0
  %1558 = vmatprep.subr.mxu0 0.0
  %1559 = vmatpush1.msra.mxu0 0.0
  %1560 = vmatprep.subr.mxu0 0.0
  %1561 = vmatpush1.msra.mxu0 0.0
  %1562 = vmatprep.subr.mxu0 0.0
  %1563 = vmatpush1.msra.mxu0 0.0
  %1564 = vmatprep.subr.mxu0 0.0
  %1565 = vmatpush1.msra.mxu0 0.0
  %1566 = vmatprep.subr.mxu0 0.0
  %1567 = vmatpush1.msra.mxu0 0.0
  %1568 = vmatprep.subr.mxu0 0.0
  %1569 = vmatpush1.msra.mxu0 0.0
  %1570 = vmatprep.subr.mxu0 0.0
  %1571 = vmatpush1.msra.mxu0 0.0
  %1572 = vmatprep.mubr.f32.mxu0 0.0
  %1573 = vmatmul.mubr.f32.gmra.mrb[0].mxu0 %v1506
  %v1574 = vpop.f32.mrb[0].mxu0
  %v1575 = vadd.f32 0.0, %v1574
  %v1576 = vpop.f32.mrb[0].mxu0
  %1577 = vdwg.mxu0
  %v1578 = vadd.f32 %v1183, %v1575
  %v1579 = vxor.u32 %v1578, 2147483648
  %v1580 = vmul.f32 %v1579, 1.442695
  %v1581 = vpow.pop %v1580
  %v1582 = vadd.f32 %v1581, 1.0
  %v1583 = vrcp.pop %v1582
  %v1584 = vmul.f32 1.0, %v1583
  %v1585 = vtanh.pop %v1578
  %v1586 = vmul.f32 %v1584, %v1496
  %1588 = vrot.lane.b32.xlu0 %v1585, 32
  %v1589 = vpop.permute.xlu0 %1588
  %v1591 = vmul.f32 %v1584, %v1589
  %1593 = vrot.lane.b32.xlu0 %v1591, 32
  %v1594 = vpop.permute.xlu0 %1593
  %v1596 = vadd.f32 %v1586, %v1594
  %v1597 = vtanh.pop %v1596
  %1599 = vrot.lane.b32.xlu0 %v1597, 32
  %v1600 = vpop.permute.xlu0 %1599
  %v1602 = vmul.f32 %v1584, %v1600
  %1604 = vrot.lane.b32.xlu0 %v1602, 64
  %v1605 = vpop.permute.xlu0 %1604
  %v1606 = vsel %vm1068, %v1605, 0
  %1608 = vmatprep.subr.mxu0 0.0
  %1609 = vmatpush1.msra.mxu0 %v53
  %1610 = vmatprep.subr.mxu0 0.0
  %1611 = vmatpush1.msra.mxu0 %v54
  %1612 = vmatprep.subr.mxu0 0.0
  %1613 = vmatpush1.msra.mxu0 %v55
  %1614 = vmatprep.subr.mxu0 0.0
  %1615 = vmatpush1.msra.mxu0 %v56
  %1616 = vmatprep.subr.mxu0 0.0
  %1617 = vmatpush1.msra.mxu0 0.0
  %1618 = vmatprep.subr.mxu0 0.0
  %1619 = vmatpush1.msra.mxu0 0.0
  %1620 = vmatprep.subr.mxu0 0.0
  %1621 = vmatpush1.msra.mxu0 0.0
  %1622 = vmatprep.subr.mxu0 0.0
  %1623 = vmatpush1.msra.mxu0 0.0
  %1624 = vmatprep.subr.mxu0 0.0
  %1625 = vmatpush1.msra.mxu0 0.0
  %1626 = vmatprep.subr.mxu0 0.0
  %1627 = vmatpush1.msra.mxu0 0.0
  %1628 = vmatprep.subr.mxu0 0.0
  %1629 = vmatpush1.msra.mxu0 0.0
  %1630 = vmatprep.subr.mxu0 0.0
  %1631 = vmatpush1.msra.mxu0 0.0
  %1632 = vmatprep.subr.mxu0 0.0
  %1633 = vmatpush1.msra.mxu0 0.0
  %1634 = vmatprep.subr.mxu0 0.0
  %1635 = vmatpush1.msra.mxu0 0.0
  %1636 = vmatprep.subr.mxu0 0.0
  %1637 = vmatpush1.msra.mxu0 0.0
  %1638 = vmatprep.subr.mxu0 0.0
  %1639 = vmatpush1.msra.mxu0 0.0
  %1640 = vmatprep.subr.mxu0 0.0
  %1641 = vmatpush1.msra.mxu0 0.0
  %1642 = vmatprep.subr.mxu0 0.0
  %1643 = vmatpush1.msra.mxu0 0.0
  %1644 = vmatprep.subr.mxu0 0.0
  %1645 = vmatpush1.msra.mxu0 0.0
  %1646 = vmatprep.subr.mxu0 0.0
  %1647 = vmatpush1.msra.mxu0 0.0
  %1648 = vmatprep.subr.mxu0 0.0
  %1649 = vmatpush1.msra.mxu0 0.0
  %1650 = vmatprep.subr.mxu0 0.0
  %1651 = vmatpush1.msra.mxu0 0.0
  %1652 = vmatprep.subr.mxu0 0.0
  %1653 = vmatpush1.msra.mxu0 0.0
  %1654 = vmatprep.subr.mxu0 0.0
  %1655 = vmatpush1.msra.mxu0 0.0
  %1656 = vmatprep.subr.mxu0 0.0
  %1657 = vmatpush1.msra.mxu0 0.0
  %1658 = vmatprep.subr.mxu0 0.0
  %1659 = vmatpush1.msra.mxu0 0.0
  %1660 = vmatprep.subr.mxu0 0.0
  %1661 = vmatpush1.msra.mxu0 0.0
  %1662 = vmatprep.subr.mxu0 0.0
  %1663 = vmatpush1.msra.mxu0 0.0
  %1664 = vmatprep.subr.mxu0 0.0
  %1665 = vmatpush1.msra.mxu0 0.0
  %1666 = vmatprep.subr.mxu0 0.0
  %1667 = vmatpush1.msra.mxu0 0.0
  %1668 = vmatprep.subr.mxu0 0.0
  %1669 = vmatpush1.msra.mxu0 0.0
  %1670 = vmatprep.subr.mxu0 0.0
  %1671 = vmatpush1.msra.mxu0 0.0
  %1672 = vmatprep.mubr.f32.mxu0 0.0
  %1673 = vmatmul.mubr.f32.gmra.mrb[0].mxu0 %v1606
  %v1674 = vpop.f32.mrb[0].mxu0
  %v1675 = vadd.f32 0.0, %v1674
  %v1676 = vpop.f32.mrb[0].mxu0
  %1677 = vdwg.mxu0
  %v1678 = vadd.f32 %v1188, %v1675
  %v1679 = vxor.u32 %v1678, 2147483648
  %v1680 = vmul.f32 %v1679, 1.442695
  %v1681 = vpow.pop %v1680
  %v1682 = vadd.f32 %v1681, 1.0
  %v1683 = vrcp.pop %v1682
  %v1684 = vmul.f32 1.0, %v1683
  %v1685 = vtanh.pop %v1678
  %v1686 = vmul.f32 %v1684, %v1596
  %1688 = vrot.lane.b32.xlu0 %v1685, 32
  %v1689 = vpop.permute.xlu0 %1688
  %v1691 = vmul.f32 %v1684, %v1689
  %1693 = vrot.lane.b32.xlu0 %v1691, 32
  %v1694 = vpop.permute.xlu0 %1693
  %v1696 = vadd.f32 %v1686, %v1694
  %v1697 = vtanh.pop %v1696
  %1699 = vrot.lane.b32.xlu0 %v1697, 32
  %v1700 = vpop.permute.xlu0 %1699
  %v1702 = vmul.f32 %v1684, %v1700
  %1704 = vrot.lane.b32.xlu0 %v1702, 64
  %v1705 = vpop.permute.xlu0 %1704
  %v1706 = vsel %vm1068, %v1705, 0
  %1708 = vmatprep.subr.mxu0 0.0
  %1709 = vmatpush1.msra.mxu0 %v53
  %1710 = vmatprep.subr.mxu0 0.0
  %1711 = vmatpush1.msra.mxu0 %v54
  %1712 = vmatprep.subr.mxu0 0.0
  %1713 = vmatpush1.msra.mxu0 %v55
  %1714 = vmatprep.subr.mxu0 0.0
  %1715 = vmatpush1.msra.mxu0 %v56
  %1716 = vmatprep.subr.mxu0 0.0
  %1717 = vmatpush1.msra.mxu0 0.0
  %1718 = vmatprep.subr.mxu0 0.0
  %1719 = vmatpush1.msra.mxu0 0.0
  %1720 = vmatprep.subr.mxu0 0.0
  %1721 = vmatpush1.msra.mxu0 0.0
  %1722 = vmatprep.subr.mxu0 0.0
  %1723 = vmatpush1.msra.mxu0 0.0
  %1724 = vmatprep.subr.mxu0 0.0
  %1725 = vmatpush1.msra.mxu0 0.0
  %1726 = vmatprep.subr.mxu0 0.0
  %1727 = vmatpush1.msra.mxu0 0.0
  %1728 = vmatprep.subr.mxu0 0.0
  %1729 = vmatpush1.msra.mxu0 0.0
  %1730 = vmatprep.subr.mxu0 0.0
  %1731 = vmatpush1.msra.mxu0 0.0
  %1732 = vmatprep.subr.mxu0 0.0
  %1733 = vmatpush1.msra.mxu0 0.0
  %1734 = vmatprep.subr.mxu0 0.0
  %1735 = vmatpush1.msra.mxu0 0.0
  %1736 = vmatprep.subr.mxu0 0.0
  %1737 = vmatpush1.msra.mxu0 0.0
  %1738 = vmatprep.subr.mxu0 0.0
  %1739 = vmatpush1.msra.mxu0 0.0
  %1740 = vmatprep.subr.mxu0 0.0
  %1741 = vmatpush1.msra.mxu0 0.0
  %1742 = vmatprep.subr.mxu0 0.0
  %1743 = vmatpush1.msra.mxu0 0.0
  %1744 = vmatprep.subr.mxu0 0.0
  %1745 = vmatpush1.msra.mxu0 0.0
  %1746 = vmatprep.subr.mxu0 0.0
  %1747 = vmatpush1.msra.mxu0 0.0
  %1748 = vmatprep.subr.mxu0 0.0
  %1749 = vmatpush1.msra.mxu0 0.0
  %1750 = vmatprep.subr.mxu0 0.0
  %1751 = vmatpush1.msra.mxu0 0.0
  %1752 = vmatprep.subr.mxu0 0.0
  %1753 = vmatpush1.msra.mxu0 0.0
  %1754 = vmatprep.subr.mxu0 0.0
  %1755 = vmatpush1.msra.mxu0 0.0
  %1756 = vmatprep.subr.mxu0 0.0
  %1757 = vmatpush1.msra.mxu0 0.0
  %1758 = vmatprep.subr.mxu0 0.0
  %1759 = vmatpush1.msra.mxu0 0.0
  %1760 = vmatprep.subr.mxu0 0.0
  %1761 = vmatpush1.msra.mxu0 0.0
  %1762 = vmatprep.subr.mxu0 0.0
  %1763 = vmatpush1.msra.mxu0 0.0
  %1764 = vmatprep.subr.mxu0 0.0
  %1765 = vmatpush1.msra.mxu0 0.0
  %1766 = vmatprep.subr.mxu0 0.0
  %1767 = vmatpush1.msra.mxu0 0.0
  %1768 = vmatprep.subr.mxu0 0.0
  %1769 = vmatpush1.msra.mxu0 0.0
  %1770 = vmatprep.subr.mxu0 0.0
  %1771 = vmatpush1.msra.mxu0 0.0
  %1772 = vmatprep.mubr.f32.mxu0 0.0
  %1773 = vmatmul.mubr.f32.gmra.mrb[0].mxu0 %v1706
  %v1774 = vpop.f32.mrb[0].mxu0
  %v1775 = vadd.f32 0.0, %v1774
  %v1776 = vpop.f32.mrb[0].mxu0
  %1777 = vdwg.mxu0
  %v1778 = vadd.f32 %v1193, %v1775
  %v1779 = vxor.u32 %v1778, 2147483648
  %v1780 = vmul.f32 %v1779, 1.442695
  %v1781 = vpow.pop %v1780
  %v1782 = vadd.f32 %v1781, 1.0
  %v1783 = vrcp.pop %v1782
  %v1784 = vmul.f32 1.0, %v1783
  %v1785 = vtanh.pop %v1778
  %v1786 = vmul.f32 %v1784, %v1696
  %1788 = vrot.lane.b32.xlu0 %v1785, 32
  %v1789 = vpop.permute.xlu0 %1788
  %v1791 = vmul.f32 %v1784, %v1789
  %1793 = vrot.lane.b32.xlu0 %v1791, 32
  %v1794 = vpop.permute.xlu0 %1793
  %v1796 = vadd.f32 %v1786, %v1794
  %v1797 = vtanh.pop %v1796
  %1799 = vrot.lane.b32.xlu0 %v1797, 32
  %v1800 = vpop.permute.xlu0 %1799
  %v1802 = vmul.f32 %v1784, %v1800
  %1804 = vrot.lane.b32.xlu0 %v1802, 64
  %v1805 = vpop.permute.xlu0 %1804
  %v1806 = vsel %vm1068, %v1805, 0
  %1808 = vmatprep.subr.mxu0 0.0
  %1809 = vmatpush1.msra.mxu0 %v53
  %1810 = vmatprep.subr.mxu0 0.0
  %1811 = vmatpush1.msra.mxu0 %v54
  %1812 = vmatprep.subr.mxu0 0.0
  %1813 = vmatpush1.msra.mxu0 %v55
  %1814 = vmatprep.subr.mxu0 0.0
  %1815 = vmatpush1.msra.mxu0 %v56
  %1816 = vmatprep.subr.mxu0 0.0
  %1817 = vmatpush1.msra.mxu0 0.0
  %1818 = vmatprep.subr.mxu0 0.0
  %1819 = vmatpush1.msra.mxu0 0.0
  %1820 = vmatprep.subr.mxu0 0.0
  %1821 = vmatpush1.msra.mxu0 0.0
  %1822 = vmatprep.subr.mxu0 0.0
  %1823 = vmatpush1.msra.mxu0 0.0
  %1824 = vmatprep.subr.mxu0 0.0
  %1825 = vmatpush1.msra.mxu0 0.0
  %1826 = vmatprep.subr.mxu0 0.0
  %1827 = vmatpush1.msra.mxu0 0.0
  %1828 = vmatprep.subr.mxu0 0.0
  %1829 = vmatpush1.msra.mxu0 0.0
  %1830 = vmatprep.subr.mxu0 0.0
  %1831 = vmatpush1.msra.mxu0 0.0
  %1832 = vmatprep.subr.mxu0 0.0
  %1833 = vmatpush1.msra.mxu0 0.0
  %1834 = vmatprep.subr.mxu0 0.0
  %1835 = vmatpush1.msra.mxu0 0.0
  %1836 = vmatprep.subr.mxu0 0.0
  %1837 = vmatpush1.msra.mxu0 0.0
  %1838 = vmatprep.subr.mxu0 0.0
  %1839 = vmatpush1.msra.mxu0 0.0
  %1840 = vmatprep.subr.mxu0 0.0
  %1841 = vmatpush1.msra.mxu0 0.0
  %1842 = vmatprep.subr.mxu0 0.0
  %1843 = vmatpush1.msra.mxu0 0.0
  %1844 = vmatprep.subr.mxu0 0.0
  %1845 = vmatpush1.msra.mxu0 0.0
  %1846 = vmatprep.subr.mxu0 0.0
  %1847 = vmatpush1.msra.mxu0 0.0
  %1848 = vmatprep.subr.mxu0 0.0
  %1849 = vmatpush1.msra.mxu0 0.0
  %1850 = vmatprep.subr.mxu0 0.0
  %1851 = vmatpush1.msra.mxu0 0.0
  %1852 = vmatprep.subr.mxu0 0.0
  %1853 = vmatpush1.msra.mxu0 0.0
  %1854 = vmatprep.subr.mxu0 0.0
  %1855 = vmatpush1.msra.mxu0 0.0
  %1856 = vmatprep.subr.mxu0 0.0
  %1857 = vmatpush1.msra.mxu0 0.0
  %1858 = vmatprep.subr.mxu0 0.0
  %1859 = vmatpush1.msra.mxu0 0.0
  %1860 = vmatprep.subr.mxu0 0.0
  %1861 = vmatpush1.msra.mxu0 0.0
  %1862 = vmatprep.subr.mxu0 0.0
  %1863 = vmatpush1.msra.mxu0 0.0
  %1864 = vmatprep.subr.mxu0 0.0
  %1865 = vmatpush1.msra.mxu0 0.0
  %1866 = vmatprep.subr.mxu0 0.0
  %1867 = vmatpush1.msra.mxu0 0.0
  %1868 = vmatprep.subr.mxu0 0.0
  %1869 = vmatpush1.msra.mxu0 0.0
  %1870 = vmatprep.subr.mxu0 0.0
  %1871 = vmatpush1.msra.mxu0 0.0
  %1872 = vmatprep.mubr.f32.mxu0 0.0
  %1873 = vmatmul.mubr.f32.gmra.mrb[0].mxu0 %v1806
  %v1874 = vpop.f32.mrb[0].mxu0
  %v1875 = vadd.f32 0.0, %v1874
  %v1876 = vpop.f32.mrb[0].mxu0
  %1877 = vdwg.mxu0
  %v1878 = vadd.f32 %v1198, %v1875
  %v1879 = vxor.u32 %v1878, 2147483648
  %v1880 = vmul.f32 %v1879, 1.442695
  %v1881 = vpow.pop %v1880
  %v1882 = vadd.f32 %v1881, 1.0
  %v1883 = vrcp.pop %v1882
  %v1884 = vmul.f32 1.0, %v1883
  %v1885 = vtanh.pop %v1878
  %v1886 = vmul.f32 %v1884, %v1796
  %1888 = vrot.lane.b32.xlu0 %v1885, 32
  %v1889 = vpop.permute.xlu0 %1888
  %v1891 = vmul.f32 %v1884, %v1889
  %1893 = vrot.lane.b32.xlu0 %v1891, 32
  %v1894 = vpop.permute.xlu0 %1893
  %v1896 = vadd.f32 %v1886, %v1894
  %v1897 = vtanh.pop %v1896
  %1899 = vrot.lane.b32.xlu0 %v1897, 32
  %v1900 = vpop.permute.xlu0 %1899
  %v1902 = vmul.f32 %v1884, %v1900
  %1904 = vrot.lane.b32.xlu0 %v1902, 64
  %v1905 = vpop.permute.xlu0 %1904
  %v1906 = vsel %vm1068, %v1905, 0
  %1908 = vmatprep.subr.mxu0 0.0
  %1909 = vmatpush1.msra.mxu0 %v53
  %1910 = vmatprep.subr.mxu0 0.0
  %1911 = vmatpush1.msra.mxu0 %v54
  %1912 = vmatprep.subr.mxu0 0.0
  %1913 = vmatpush1.msra.mxu0 %v55
  %1914 = vmatprep.subr.mxu0 0.0
  %1915 = vmatpush1.msra.mxu0 %v56
  %1916 = vmatprep.subr.mxu0 0.0
  %1917 = vmatpush1.msra.mxu0 0.0
  %1918 = vmatprep.subr.mxu0 0.0
  %1919 = vmatpush1.msra.mxu0 0.0
  %1920 = vmatprep.subr.mxu0 0.0
  %1921 = vmatpush1.msra.mxu0 0.0
  %1922 = vmatprep.subr.mxu0 0.0
  %1923 = vmatpush1.msra.mxu0 0.0
  %1924 = vmatprep.subr.mxu0 0.0
  %1925 = vmatpush1.msra.mxu0 0.0
  %1926 = vmatprep.subr.mxu0 0.0
  %1927 = vmatpush1.msra.mxu0 0.0
  %1928 = vmatprep.subr.mxu0 0.0
  %1929 = vmatpush1.msra.mxu0 0.0
  %1930 = vmatprep.subr.mxu0 0.0
  %1931 = vmatpush1.msra.mxu0 0.0
  %1932 = vmatprep.subr.mxu0 0.0
  %1933 = vmatpush1.msra.mxu0 0.0
  %1934 = vmatprep.subr.mxu0 0.0
  %1935 = vmatpush1.msra.mxu0 0.0
  %1936 = vmatprep.subr.mxu0 0.0
  %1937 = vmatpush1.msra.mxu0 0.0
  %1938 = vmatprep.subr.mxu0 0.0
  %1939 = vmatpush1.msra.mxu0 0.0
  %1940 = vmatprep.subr.mxu0 0.0
  %1941 = vmatpush1.msra.mxu0 0.0
  %1942 = vmatprep.subr.mxu0 0.0
  %1943 = vmatpush1.msra.mxu0 0.0
  %1944 = vmatprep.subr.mxu0 0.0
  %1945 = vmatpush1.msra.mxu0 0.0
  %1946 = vmatprep.subr.mxu0 0.0
  %1947 = vmatpush1.msra.mxu0 0.0
  %1948 = vmatprep.subr.mxu0 0.0
  %1949 = vmatpush1.msra.mxu0 0.0
  %1950 = vmatprep.subr.mxu0 0.0
  %1951 = vmatpush1.msra.mxu0 0.0
  %1952 = vmatprep.subr.mxu0 0.0
  %1953 = vmatpush1.msra.mxu0 0.0
  %1954 = vmatprep.subr.mxu0 0.0
  %1955 = vmatpush1.msra.mxu0 0.0
  %1956 = vmatprep.subr.mxu0 0.0
  %1957 = vmatpush1.msra.mxu0 0.0
  %1958 = vmatprep.subr.mxu0 0.0
  %1959 = vmatpush1.msra.mxu0 0.0
  %1960 = vmatprep.subr.mxu0 0.0
  %1961 = vmatpush1.msra.mxu0 0.0
  %1962 = vmatprep.subr.mxu0 0.0
  %1963 = vmatpush1.msra.mxu0 0.0
  %1964 = vmatprep.subr.mxu0 0.0
  %1965 = vmatpush1.msra.mxu0 0.0
  %1966 = vmatprep.subr.mxu0 0.0
  %1967 = vmatpush1.msra.mxu0 0.0
  %1968 = vmatprep.subr.mxu0 0.0
  %1969 = vmatpush1.msra.mxu0 0.0
  %1970 = vmatprep.subr.mxu0 0.0
  %1971 = vmatpush1.msra.mxu0 0.0
  %1972 = vmatprep.mubr.f32.mxu0 0.0
  %1973 = vmatmul.mubr.f32.gmra.mrb[0].mxu0 %v1906
  %v1974 = vpop.f32.mrb[0].mxu0
  %v1975 = vadd.f32 0.0, %v1974
  %v1976 = vpop.f32.mrb[0].mxu0
  %1977 = vdwg.mxu0
  %v1978 = vadd.f32 %v1203, %v1975
  %v1979 = vxor.u32 %v1978, 2147483648
  %v1980 = vmul.f32 %v1979, 1.442695
  %v1981 = vpow.pop %v1980
  %v1982 = vadd.f32 %v1981, 1.0
  %v1983 = vrcp.pop %v1982
  %v1984 = vmul.f32 1.0, %v1983
  %v1985 = vtanh.pop %v1978
  %v1986 = vmul.f32 %v1984, %v1896
  %1988 = vrot.lane.b32.xlu0 %v1985, 32
  %v1989 = vpop.permute.xlu0 %1988
  %v1991 = vmul.f32 %v1984, %v1989
  %1993 = vrot.lane.b32.xlu0 %v1991, 32
  %v1994 = vpop.permute.xlu0 %1993
  %v1996 = vadd.f32 %v1986, %v1994
  %v1997 = vtanh.pop %v1996
  %1999 = vrot.lane.b32.xlu0 %v1997, 32
  %v2000 = vpop.permute.xlu0 %1999
  %v2002 = vmul.f32 %v1984, %v2000
  %2004 = vrot.lane.b32.xlu0 %v2002, 64
  %v2005 = vpop.permute.xlu0 %2004
  %v2006 = vsel %vm1068, %v2005, 0
  %2008 = vmatprep.subr.mxu0 0.0
  %2009 = vmatpush1.msra.mxu0 %v58
  %2010 = vmatprep.subr.mxu0 0.0
  %2011 = vmatpush1.msra.mxu0 %v59
  %2012 = vmatprep.subr.mxu0 0.0
  %2013 = vmatpush1.msra.mxu0 %v60
  %2014 = vmatprep.subr.mxu0 0.0
  %2015 = vmatpush1.msra.mxu0 %v61
  %2016 = vmatprep.subr.mxu0 0.0
  %2017 = vmatpush1.msra.mxu0 0.0
  %2018 = vmatprep.subr.mxu0 0.0
  %2019 = vmatpush1.msra.mxu0 0.0
  %2020 = vmatprep.subr.mxu0 0.0
  %2021 = vmatpush1.msra.mxu0 0.0
  %2022 = vmatprep.subr.mxu0 0.0
  %2023 = vmatpush1.msra.mxu0 0.0
  %2024 = vmatprep.subr.mxu0 0.0
  %2025 = vmatpush1.msra.mxu0 0.0
  %2026 = vmatprep.subr.mxu0 0.0
  %2027 = vmatpush1.msra.mxu0 0.0
  %2028 = vmatprep.subr.mxu0 0.0
  %2029 = vmatpush1.msra.mxu0 0.0
  %2030 = vmatprep.subr.mxu0 0.0
  %2031 = vmatpush1.msra.mxu0 0.0
  %2032 = vmatprep.subr.mxu0 0.0
  %2033 = vmatpush1.msra.mxu0 0.0
  %2034 = vmatprep.subr.mxu0 0.0
  %2035 = vmatpush1.msra.mxu0 0.0
  %2036 = vmatprep.subr.mxu0 0.0
  %2037 = vmatpush1.msra.mxu0 0.0
  %2038 = vmatprep.subr.mxu0 0.0
  %2039 = vmatpush1.msra.mxu0 0.0
  %2040 = vmatprep.subr.mxu0 0.0
  %2041 = vmatpush1.msra.mxu0 0.0
  %2042 = vmatprep.subr.mxu0 0.0
  %2043 = vmatpush1.msra.mxu0 0.0
  %2044 = vmatprep.subr.mxu0 0.0
  %2045 = vmatpush1.msra.mxu0 0.0
  %2046 = vmatprep.subr.mxu0 0.0
  %2047 = vmatpush1.msra.mxu0 0.0
  %2048 = vmatprep.subr.mxu0 0.0
  %2049 = vmatpush1.msra.mxu0 0.0
  %2050 = vmatprep.subr.mxu0 0.0
  %2051 = vmatpush1.msra.mxu0 0.0
  %2052 = vmatprep.subr.mxu0 0.0
  %2053 = vmatpush1.msra.mxu0 0.0
  %2054 = vmatprep.subr.mxu0 0.0
  %2055 = vmatpush1.msra.mxu0 0.0
  %2056 = vmatprep.subr.mxu0 0.0
  %2057 = vmatpush1.msra.mxu0 0.0
  %2058 = vmatprep.subr.mxu0 0.0
  %2059 = vmatpush1.msra.mxu0 0.0
  %2060 = vmatprep.subr.mxu0 0.0
  %2061 = vmatpush1.msra.mxu0 0.0
  %2062 = vmatprep.subr.mxu0 0.0
  %2063 = vmatpush1.msra.mxu0 0.0
  %2064 = vmatprep.subr.mxu0 0.0
  %2065 = vmatpush1.msra.mxu0 0.0
  %2066 = vmatprep.subr.mxu0 0.0
  %2067 = vmatpush1.msra.mxu0 0.0
  %2068 = vmatprep.subr.mxu0 0.0
  %2069 = vmatpush1.msra.mxu0 0.0
  %2070 = vmatprep.subr.mxu0 0.0
  %2071 = vmatpush1.msra.mxu0 0.0
  %2072 = vmatprep.mubr.f32.mxu0 0.0
  %2073 = vmatmul.mubr.f32.gmra.mrb[0].mxu0 %v2006
  %v2074 = vpop.f32.mrb[0].mxu0
  %v2075 = vadd.f32 %v62, %v2074
  %v2076 = vpop.f32.mrb[0].mxu0
  %2077 = vdwg.mxu0
  %2078 = vmax.xlane.f32.xlu0 %v2075
  %v2079 = vpop.xlane.xlu0 %2078
  %v2080 = vsub.f32 %v2075, %v2079
  %v2081 = vmul.f32 %v2080, 1.442695
  %v2082 = vpow.pop %v2081
  %2083 = vadd.xlane.f32.xlu0 %v2082
  %v2084 = vpop.xlane.xlu0 %2083
  %v2085 = vlog2.pop %v2084
  %v2086 = vmul.f32 %v2085, 0.6931472
  %v2087 = vsub.f32 %v2080, %v2086
  %2088 = vst [vmem:[%s2] sm:$0xff] %v2087
  // Predicated region
  $region10: #{my_model_forward.1} parent=0 // pred_check
    _
  $region11: #{my_model_forward.1} parent=0 // pred_check_branch
    %2090 = sbr.rel (0) target = $region13
  $region12: #{my_model_forward.1} parent=0 // pred_region
    _
  $region13: #{my_model_forward.1} parent=0 // pred_fallthru
    _
  // Predicated region
  $region14: #{my_model_forward.1} parent=0 // pred_check
    _
  $region15: #{my_model_forward.1} parent=0 // pred_check_branch
    %2092 = sbr.rel (0) target = $region17
  $region16: #{my_model_forward.1} parent=0 // pred_region
    _
  $region17: #{my_model_forward.1} parent=0 // pred_fallthru
    _

</llo_original>
